<compile_context>
chip_gen: v6e
topology: v6e:2x2x1
jax: 0.10.0
libtpu: 0.0.40
codegen_flags: <defaults>
</compile_context>

<pallas_src>
import functools

import jax
import jax.numpy as jnp
from jax.experimental import pallas as pl
from jax.experimental.pallas import tpu as pltpu


# ---------------------------------------------------------------------------
# Single fused kernel: embed + conv1x1 + BN + ReLU + AvgPool + both RNN heads
# ---------------------------------------------------------------------------
def _calib_kernel(patch_ref, pts_ref, wc_ref, bc_ref, wp_ref, bp_ref,
                  coef_ref, g_ref, w_ih_ref, b_ih_ref, w_ho_ref, b_ho_ref,
                  out_ref, ys_ref, *, eps):
    """patch_ref : (B*P, Kp) bf16   flattened image patches
       pts_ref   : (B*N, Kq) bf16   flattened [xyz | feat] points
       wc/bc     : (Kp, F) bf16 / (1, F) f32   patch embedding projection
       wp/bp     : (Kq, F) bf16 / (1, F) f32   point embedding projection
       coef_ref  : (3, 2C, 1) f32  rows = [gamma*w_conv, w_conv^2, beta],
                                   channel order [tran..., rot...]
       g_ref     : (B, B*P + B*N) f32  batch-grouping matrix (row -> batch)
       w_ih/b_ih : (2C, 2H) / (1, 2H) f32  block-diag RNN input weights
       w_ho/b_ho : (2H, 6) / (1, 6)  f32   block-diag RNN output weights
       out_ref   : (B, 6) f32
       ys_ref    : (B*P + B*N, 2C) f32 VMEM scratch (per-row channel sums)
    """
    BP = patch_ref.shape[0]
    BN = pts_ref.shape[0]
    B = g_ref.shape[0]
    F = wc_ref.shape[1]
    C2 = coef_ref.shape[1]

    # ---- Patch / point embeddings: two big-M bf16 MXU matmuls, f32 acc ----
    xi = jnp.dot(patch_ref[...], wc_ref[...],
                 preferred_element_type=jnp.float32) + bc_ref[...]   # (BP, F)
    xl = jnp.dot(pts_ref[...], wp_ref[...],
                 preferred_element_type=jnp.float32) + bp_ref[...]   # (BN, F)
    # Round once to bf16 so the statistics and the affine path see the same
    # values (features never leave VMEM).
    xi_b = xi.astype(jnp.bfloat16)
    xl_b = xl.astype(jnp.bfloat16)
    xi32 = xi_b.astype(jnp.float32)
    xl32 = xl_b.astype(jnp.float32)

    # ---- BatchNorm batch statistics (training mode, biased variance) ------
    # Shared by every channel of BOTH branches because the 1x1 conv is a pure
    # per-channel scale (y_c = w_c * x).  Two-pass (mean, then centred second
    # moment) avoids catastrophic cancellation of E[x^2] - E[x]^2.
    n_total = float((BP + BN) * F)                 # = B * (P + N) * F
    mean_x = (jnp.sum(xi32) + jnp.sum(xl32)) / n_total
    ci = xi32 - mean_x
    cl = xl32 - mean_x
    var_x = (jnp.sum(ci * ci) + jnp.sum(cl * cl)) / n_total

    # ---- Fold conv1x1 (no bias) + BatchNorm into per-channel a_c*x + d_c ---
    gw = coef_ref[0]                               # (2C, 1)  gamma * w_conv
    w2 = coef_ref[1]                               # (2C, 1)  w_conv^2
    beta = coef_ref[2]                             # (2C, 1)
    a = gw * jax.lax.rsqrt(w2 * var_x + eps)       # (2C, 1)
    d = beta - a * mean_x                          # (2C, 1)

    # ---- ReLU + AdaptiveAvgPool2d((1,1)) without a 2C-wide broadcast ------
    # One bf16 pass per channel (peak live temp = a single (rows, F) tile),
    # f32 lane-sums stored into the scratch.  Dropout p = 0 -> identity.
    for c in range(C2):
        a_c = a[c:c + 1, :].astype(jnp.bfloat16)   # (1, 1)
        d_c = d[c:c + 1, :].astype(jnp.bfloat16)
        yi = jnp.maximum(xi_b * a_c + d_c, 0)                      # (BP, F)
        yl = jnp.maximum(xl_b * a_c + d_c, 0)                      # (BN, F)
        ys_ref[0:BP, c:c + 1] = jnp.sum(
            yi.astype(jnp.float32), axis=-1, keepdims=True)
        ys_ref[BP:BP + BN, c:c + 1] = jnp.sum(
            yl.astype(jnp.float32), axis=-1, keepdims=True)

    # Batch-group reduction of the per-row sums with one MXU matmul; fold in
    # the 1/((P+N)*F) averaging factor of the adaptive average pool.
    inv_hw = float(B) / n_total
    pooled = jnp.dot(g_ref[...], ys_ref[...],
                     preferred_element_type=jnp.float32) * inv_hw   # (B, 2C)

    # ---- Both BasicRNN stand-ins as block-diagonal matmuls -> (B, 6) ------
    # Output order [tran(3), rot(3)] matches torch.concat([outTran, outRot]).
    h = jnp.tanh(jnp.dot(pooled, w_ih_ref[...],
                         preferred_element_type=jnp.float32) + b_ih_ref[...])
    out_ref[...] = jnp.dot(h, w_ho_ref[...],
                           preferred_element_type=jnp.float32) + b_ho_ref[...]


def transformer_calib_fused(patches, pts, w_cam, b_cam, w_pc, b_pc, coef,
                            gmat, w_ih, b_ih, w_ho, b_ho, *, eps=1e-5):
    B = gmat.shape[0]
    rows = patches.shape[0] + pts.shape[0]
    c2 = coef.shape[1]
    vmem = pl.BlockSpec(memory_space=pltpu.MemorySpace.VMEM)
    return pl.pallas_call(
        functools.partial(_calib_kernel, eps=eps),
        out_shape=jax.ShapeDtypeStruct((B, 6), jnp.float32),
        in_specs=[vmem] * 12,
        out_specs=vmem,
        scratch_shapes=[pltpu.VMEM((rows, c2), jnp.float32)],
        compiler_params=pltpu.CompilerParams(
            vmem_limit_bytes=32 * 1024 * 1024),
    )(patches, pts, w_cam, b_cam, w_pc, b_pc, coef, gmat,
      w_ih, b_ih, w_ho, b_ho)


# ---------------------------------------------------------------------------
# Glue (plain JAX): patchify, parameter construction, module wrapper
# ---------------------------------------------------------------------------
def patchify(image, patch_dim):
    # image: (B, H, W, C) NHWC
    B, H, W, C = image.shape
    ph, pw = H // patch_dim, W // patch_dim
    x = image.reshape(B, ph, patch_dim, pw, patch_dim, C)
    x = x.transpose(0, 1, 3, 2, 4, 5)
    return x.reshape(B, ph * pw, patch_dim * patch_dim * C)


class TransformerCalibPallas:
    def __init__(self, key, *, img_depth=3, patch_dim=4, mlp_feature=32,
                 pc_feat_dim=1, rt_channels=8, rt_hidden_size=16):
        self.patch_dim = patch_dim
        self.mlp_feature = mlp_feature
        self.rt_channels = rt_channels
        self.rt_hidden_size = rt_hidden_size

        keys = jax.random.split(key, 16)
        patch_in = patch_dim * patch_dim * img_depth
        pc_in = 3 + pc_feat_dim
        s = 0.1
        # Cam_ViT / PC_Trs stand-in embeddings (see TODO at top of file).
        self.w_cam = s * jax.random.normal(keys[0], (patch_in, mlp_feature))
        self.b_cam = s * jax.random.normal(keys[1], (mlp_feature,))
        self.w_pc = s * jax.random.normal(keys[2], (pc_in, mlp_feature))
        self.b_pc = s * jax.random.normal(keys[3], (mlp_feature,))
        # convRot / convTran: Conv2d(1, rt_channels, 1, bias=False) -> (C,) scale.
        self.w_conv_rot = s * jax.random.normal(keys[4], (rt_channels,))
        self.w_conv_tran = s * jax.random.normal(keys[5], (rt_channels,))
        # bnRot / bnTran affine params.
        self.g_rot = 1.0 + s * jax.random.normal(keys[6], (rt_channels,))
        self.b_rot = s * jax.random.normal(keys[7], (rt_channels,))
        self.g_tran = 1.0 + s * jax.random.normal(keys[8], (rt_channels,))
        self.b_tran = s * jax.random.normal(keys[9], (rt_channels,))
        # rotrnn / tranrnn (BasicRNN stand-in, single step).
        self.rot_w_ih = s * jax.random.normal(keys[10], (rt_channels, rt_hidden_size))
        self.rot_b_ih = s * jax.random.normal(keys[11], (rt_hidden_size,))
        self.rot_w_ho = s * jax.random.normal(keys[12], (rt_hidden_size, 3))
        self.rot_b_ho = jnp.zeros((3,), jnp.float32)
        self.tran_w_ih = s * jax.random.normal(keys[13], (rt_channels, rt_hidden_size))
        self.tran_b_ih = s * jax.random.normal(keys[14], (rt_hidden_size,))
        self.tran_w_ho = s * jax.random.normal(keys[15], (rt_hidden_size, 3))
        self.tran_b_ho = jnp.zeros((3,), jnp.float32)

        # --- Pre-packed kernel parameters (host-side, once) ---
        C, Hd = rt_channels, rt_hidden_size
        # Per-channel coeffs, order [tran..., rot...]; rows = gamma*w, w^2, beta
        # (gamma*w and w^2 pre-multiplied host-side so the kernel only folds
        #  in the batch statistics).
        gw = jnp.concatenate([self.g_tran * self.w_conv_tran,
                              self.g_rot * self.w_conv_rot])
        w2 = jnp.concatenate([self.w_conv_tran ** 2, self.w_conv_rot ** 2])
        bb = jnp.concatenate([self.b_tran, self.b_rot])
        self.coef = jnp.stack([gw, w2, bb]).reshape(3, 2 * C, 1).astype(jnp.float32)
        # Block-diagonal RNN weights so both heads run as one matmul pair.
        w_ih = jnp.zeros((2 * C, 2 * Hd), jnp.float32)
        w_ih = w_ih.at[:C, :Hd].set(self.tran_w_ih).at[C:, Hd:].set(self.rot_w_ih)
        self.w_ih_blk = w_ih
        self.b_ih_blk = jnp.concatenate(
            [self.tran_b_ih, self.rot_b_ih]).reshape(1, 2 * Hd).astype(jnp.float32)
        w_ho = jnp.zeros((2 * Hd, 6), jnp.float32)
        w_ho = w_ho.at[:Hd, :3].set(self.tran_w_ho).at[Hd:, 3:].set(self.rot_w_ho)
        self.w_ho_blk = w_ho
        self.b_ho_blk = jnp.concatenate(
            [self.tran_b_ho, self.rot_b_ho]).reshape(1, 6).astype(jnp.float32)

    def __call__(self, image, position, feature):
        B = image.shape[0]
        bf16 = jnp.bfloat16
        F = self.mlp_feature

        # TODO(synk): fold patchify into the kernel (BlockSpec index_map /
        #             per-patch-row matmuls) for production image resolutions.
        patches = patchify(image, self.patch_dim)               # (B, P, Kp)
        P = patches.shape[1]
        patches = patches.reshape(B * P, -1).astype(bf16)

        # TODO(synk): split position/feature into two in-kernel K-slices to
        #             avoid this host-side concat of the point cloud.
        pts = jnp.concatenate([position, feature], axis=-1)     # (B, N, 3+D)
        N = pts.shape[1]
        pts = pts.reshape(B * N, -1).astype(bf16)

        # Batch-grouping matrix (row -> batch) over [image rows | lidar rows];
        # used by the kernel's single pooled-reduction matmul.
        row_b = jnp.concatenate([jnp.repeat(jnp.arange(B), P),
                                 jnp.repeat(jnp.arange(B), N)])
        gmat = (row_b[None, :] == jnp.arange(B)[:, None]).astype(jnp.float32)

        return transformer_calib_fused(
            patches, pts,
            self.w_cam.astype(bf16), self.b_cam.reshape(1, F).astype(jnp.float32),
            self.w_pc.astype(bf16), self.b_pc.reshape(1, F).astype(jnp.float32),
            self.coef, gmat,
            self.w_ih_blk, self.b_ih_blk, self.w_ho_blk, self.b_ho_blk)


if __name__ == "__main__":
    key = jax.random.PRNGKey(0)
    k_img, k_pos, k_feat, k_params = jax.random.split(key, 4)

    B, H, W, C = 2, 16, 16, 3
    N_PTS, PC_D = 8, 1
    image = jax.random.normal(k_img, (B, H, W, C), dtype=jnp.float32)
    position = jax.random.normal(k_pos, (B, N_PTS, 3), dtype=jnp.float32)
    feature = jax.random.normal(k_feat, (B, N_PTS, PC_D), dtype=jnp.float32)

    model = TransformerCalibPallas(k_params, img_depth=C, patch_dim=4,
                                   mlp_feature=32, pc_feat_dim=PC_D,
                                   rt_channels=8, rt_hidden_size=16)

    fwd = jax.jit(lambda im, pos, feat: model(im, pos, feat))
    out = jax.block_until_ready(fwd(image, position, feature))
    assert out.shape == (B, 6), out.shape
    print("KERNEL_OK")
</pallas_src>

<mosaic_0001>
module attributes {stable_mosaic.version = 11 : i64} {
  func.func @_calib_kernel(%arg0: memref<32x48xbf16, #tpu.memory_space<vmem>>, %arg1: memref<16x4xbf16, #tpu.memory_space<vmem>>, %arg2: memref<48x32xbf16, #tpu.memory_space<vmem>>, %arg3: memref<1x32xf32, #tpu.memory_space<vmem>>, %arg4: memref<4x32xbf16, #tpu.memory_space<vmem>>, %arg5: memref<1x32xf32, #tpu.memory_space<vmem>>, %arg6: memref<3x16x1xf32, #tpu.memory_space<vmem>>, %arg7: memref<2x48xf32, #tpu.memory_space<vmem>>, %arg8: memref<16x32xf32, #tpu.memory_space<vmem>>, %arg9: memref<1x32xf32, #tpu.memory_space<vmem>>, %arg10: memref<32x6xf32, #tpu.memory_space<vmem>>, %arg11: memref<1x6xf32, #tpu.memory_space<vmem>>, %arg12: memref<2x6xf32, #tpu.memory_space<vmem>>, %arg13: memref<48x16xf32, #tpu.memory_space<vmem>>) attributes {dimension_semantics = [], scalar_prefetch = 0 : i64, scratch_operands = 1 : i64, tpu.core_type = #tpu.core_type<tc>} {
    %c0 = arith.constant 0 : index
    %c0_0 = arith.constant 0 : index
    %0 = vector.load %arg0[%c0, %c0_0] : memref<32x48xbf16, #tpu.memory_space<vmem>>, vector<32x48xbf16>
    %c0_1 = arith.constant 0 : index
    %c0_2 = arith.constant 0 : index
    %1 = vector.load %arg2[%c0_1, %c0_2] : memref<48x32xbf16, #tpu.memory_space<vmem>>, vector<48x32xbf16>
    %cst = arith.constant dense<0.000000e+00> : vector<32x32xf32>
    %2 = tpu.matmul %0, %1, %cst {dimension_numbers = #tpu.dot_dimension_numbers<[1], [0], [0], [1], [0, 0, 1, 1], [], []>} : vector<32x48xbf16>, vector<48x32xbf16>, vector<32x32xf32> -> vector<32x32xf32>
    %c0_3 = arith.constant 0 : index
    %c0_4 = arith.constant 0 : index
    %3 = vector.load %arg3[%c0_3, %c0_4] : memref<1x32xf32, #tpu.memory_space<vmem>>, vector<1x32xf32>
    %4 = vector.broadcast %3 : vector<1x32xf32> to vector<32x32xf32>
    %5 = arith.addf %2, %4 : vector<32x32xf32>
    %c0_5 = arith.constant 0 : index
    %c0_6 = arith.constant 0 : index
    %6 = vector.load %arg1[%c0_5, %c0_6] : memref<16x4xbf16, #tpu.memory_space<vmem>>, vector<16x4xbf16>
    %c0_7 = arith.constant 0 : index
    %c0_8 = arith.constant 0 : index
    %7 = vector.load %arg4[%c0_7, %c0_8] : memref<4x32xbf16, #tpu.memory_space<vmem>>, vector<4x32xbf16>
    %cst_9 = arith.constant dense<0.000000e+00> : vector<16x32xf32>
    %8 = tpu.matmul %6, %7, %cst_9 {dimension_numbers = #tpu.dot_dimension_numbers<[1], [0], [0], [1], [0, 0, 1, 1], [], []>} : vector<16x4xbf16>, vector<4x32xbf16>, vector<16x32xf32> -> vector<16x32xf32>
    %c0_10 = arith.constant 0 : index
    %c0_11 = arith.constant 0 : index
    %9 = vector.load %arg5[%c0_10, %c0_11] : memref<1x32xf32, #tpu.memory_space<vmem>>, vector<1x32xf32>
    %10 = vector.broadcast %9 : vector<1x32xf32> to vector<16x32xf32>
    %11 = arith.addf %8, %10 : vector<16x32xf32>
    %12 = arith.truncf %5 : vector<32x32xf32> to vector<32x32xbf16>
    %13 = arith.truncf %11 : vector<16x32xf32> to vector<16x32xbf16>
    %14 = arith.extf %12 : vector<32x32xbf16> to vector<32x32xf32>
    %15 = arith.extf %13 : vector<16x32xbf16> to vector<16x32xf32>
    %16 = vector.shape_cast %14 : vector<32x32xf32> to vector<1x32x32xf32>
    %cst_12 = arith.constant dense<0.000000e+00> : vector<1xf32>
    %17 = vector.multi_reduction <add>, %16, %cst_12 [1, 2] : vector<1x32x32xf32> to vector<1xf32>
    %18 = vector.shape_cast %17 : vector<1xf32> to vector<1x1x1xf32>
    %19 = vector.extract %18[0, 0, 0] : f32 from vector<1x1x1xf32>
    %20 = vector.shape_cast %15 : vector<16x32xf32> to vector<1x16x32xf32>
    %cst_13 = arith.constant dense<0.000000e+00> : vector<1xf32>
    %21 = vector.multi_reduction <add>, %20, %cst_13 [1, 2] : vector<1x16x32xf32> to vector<1xf32>
    %22 = vector.shape_cast %21 : vector<1xf32> to vector<1x1x1xf32>
    %23 = vector.extract %22[0, 0, 0] : f32 from vector<1x1x1xf32>
    %24 = arith.addf %19, %23 : f32
    %cst_14 = arith.constant 1.536000e+03 : f32
    %25 = arith.divf %24, %cst_14 : f32
    %26 = vector.broadcast %25 : f32 to vector<32x32xf32>
    %27 = arith.subf %14, %26 : vector<32x32xf32>
    %28 = vector.broadcast %25 : f32 to vector<16x32xf32>
    %29 = arith.subf %15, %28 : vector<16x32xf32>
    %30 = arith.mulf %27, %27 : vector<32x32xf32>
    %31 = vector.shape_cast %30 : vector<32x32xf32> to vector<1x32x32xf32>
    %cst_15 = arith.constant dense<0.000000e+00> : vector<1xf32>
    %32 = vector.multi_reduction <add>, %31, %cst_15 [1, 2] : vector<1x32x32xf32> to vector<1xf32>
    %33 = vector.shape_cast %32 : vector<1xf32> to vector<1x1x1xf32>
    %34 = vector.extract %33[0, 0, 0] : f32 from vector<1x1x1xf32>
    %35 = arith.mulf %29, %29 : vector<16x32xf32>
    %36 = vector.shape_cast %35 : vector<16x32xf32> to vector<1x16x32xf32>
    %cst_16 = arith.constant dense<0.000000e+00> : vector<1xf32>
    %37 = vector.multi_reduction <add>, %36, %cst_16 [1, 2] : vector<1x16x32xf32> to vector<1xf32>
    %38 = vector.shape_cast %37 : vector<1xf32> to vector<1x1x1xf32>
    %39 = vector.extract %38[0, 0, 0] : f32 from vector<1x1x1xf32>
    %40 = arith.addf %34, %39 : f32
    %cst_17 = arith.constant 1.536000e+03 : f32
    %41 = arith.divf %40, %cst_17 : f32
    %c0_18 = arith.constant 0 : index
    %c0_19 = arith.constant 0 : index
    %c0_20 = arith.constant 0 : index
    %42 = vector.load %arg6[%c0_18, %c0_19, %c0_20] : memref<3x16x1xf32, #tpu.memory_space<vmem>>, vector<1x16x1xf32>
    %43 = vector.shape_cast %42 : vector<1x16x1xf32> to vector<16x1xf32>
    %c1 = arith.constant 1 : index
    %c0_21 = arith.constant 0 : index
    %c0_22 = arith.constant 0 : index
    %44 = vector.load %arg6[%c1, %c0_21, %c0_22] : memref<3x16x1xf32, #tpu.memory_space<vmem>>, vector<1x16x1xf32>
    %45 = vector.shape_cast %44 : vector<1x16x1xf32> to vector<16x1xf32>
    %c2 = arith.constant 2 : index
    %c0_23 = arith.constant 0 : index
    %c0_24 = arith.constant 0 : index
    %46 = vector.load %arg6[%c2, %c0_23, %c0_24] : memref<3x16x1xf32, #tpu.memory_space<vmem>>, vector<1x16x1xf32>
    %47 = vector.shape_cast %46 : vector<1x16x1xf32> to vector<16x1xf32>
    %48 = vector.broadcast %41 : f32 to vector<16x1xf32>
    %49 = arith.mulf %45, %48 : vector<16x1xf32>
    %cst_25 = arith.constant 9.99999974E-6 : f32
    %50 = vector.broadcast %cst_25 : f32 to vector<16x1xf32>
    %51 = arith.addf %49, %50 : vector<16x1xf32>
    %52 = math.rsqrt %51 : vector<16x1xf32>
    %53 = arith.mulf %43, %52 : vector<16x1xf32>
    %54 = vector.broadcast %25 : f32 to vector<16x1xf32>
    %55 = arith.mulf %53, %54 : vector<16x1xf32>
    %56 = arith.subf %47, %55 : vector<16x1xf32>
    %57 = vector.extract_strided_slice %53 {offsets = [0, 0], sizes = [1, 1], strides = [1, 1]} : vector<16x1xf32> to vector<1x1xf32>
    %58 = arith.truncf %57 : vector<1x1xf32> to vector<1x1xbf16>
    %59 = vector.extract_strided_slice %56 {offsets = [0, 0], sizes = [1, 1], strides = [1, 1]} : vector<16x1xf32> to vector<1x1xf32>
    %60 = arith.truncf %59 : vector<1x1xf32> to vector<1x1xbf16>
    %61 = vector.broadcast %58 : vector<1x1xbf16> to vector<32x32xbf16>
    %62 = arith.mulf %12, %61 : vector<32x32xbf16>
    %63 = vector.broadcast %60 : vector<1x1xbf16> to vector<32x32xbf16>
    %64 = arith.addf %62, %63 : vector<32x32xbf16>
    %cst_26 = arith.constant 0.000000e+00 : bf16
    %65 = vector.broadcast %cst_26 : bf16 to vector<32x32xbf16>
    %66 = arith.maximumf %64, %65 : vector<32x32xbf16>
    %67 = vector.broadcast %58 : vector<1x1xbf16> to vector<16x32xbf16>
    %68 = arith.mulf %13, %67 : vector<16x32xbf16>
    %69 = vector.broadcast %60 : vector<1x1xbf16> to vector<16x32xbf16>
    %70 = arith.addf %68, %69 : vector<16x32xbf16>
    %cst_27 = arith.constant 0.000000e+00 : bf16
    %71 = vector.broadcast %cst_27 : bf16 to vector<16x32xbf16>
    %72 = arith.maximumf %70, %71 : vector<16x32xbf16>
    %73 = arith.extf %66 : vector<32x32xbf16> to vector<32x32xf32>
    %cst_28 = arith.constant dense<0.000000e+00> : vector<32xf32>
    %74 = vector.multi_reduction <add>, %73, %cst_28 [1] : vector<32x32xf32> to vector<32xf32>
    %75 = vector.shape_cast %74 : vector<32xf32> to vector<32x1xf32>
    %c0_29 = arith.constant 0 : index
    %c0_30 = arith.constant 0 : index
    %76 = vector.load %arg13[%c0_29, %c0_30] : memref<48x16xf32, #tpu.memory_space<vmem>>, vector<32x1xf32>
    tpu.vector_store %arg13[%c0_29, %c0_30], %75 {strides = array<i32>} : memref<48x16xf32, #tpu.memory_space<vmem>>, vector<32x1xf32>,
    %77 = arith.extf %72 : vector<16x32xbf16> to vector<16x32xf32>
    %cst_31 = arith.constant dense<0.000000e+00> : vector<16xf32>
    %78 = vector.multi_reduction <add>, %77, %cst_31 [1] : vector<16x32xf32> to vector<16xf32>
    %79 = vector.shape_cast %78 : vector<16xf32> to vector<16x1xf32>
    %c32 = arith.constant 32 : index
    %c0_32 = arith.constant 0 : index
    %80 = vector.load %arg13[%c32, %c0_32] : memref<48x16xf32, #tpu.memory_space<vmem>>, vector<16x1xf32>
    tpu.vector_store %arg13[%c32, %c0_32], %79 {strides = array<i32>} : memref<48x16xf32, #tpu.memory_space<vmem>>, vector<16x1xf32>,
    %81 = vector.extract_strided_slice %53 {offsets = [1, 0], sizes = [1, 1], strides = [1, 1]} : vector<16x1xf32> to vector<1x1xf32>
    %82 = arith.truncf %81 : vector<1x1xf32> to vector<1x1xbf16>
    %83 = vector.extract_strided_slice %56 {offsets = [1, 0], sizes = [1, 1], strides = [1, 1]} : vector<16x1xf32> to vector<1x1xf32>
    %84 = arith.truncf %83 : vector<1x1xf32> to vector<1x1xbf16>
    %85 = vector.broadcast %82 : vector<1x1xbf16> to vector<32x32xbf16>
    %86 = arith.mulf %12, %85 : vector<32x32xbf16>
    %87 = vector.broadcast %84 : vector<1x1xbf16> to vector<32x32xbf16>
    %88 = arith.addf %86, %87 : vector<32x32xbf16>
    %cst_33 = arith.constant 0.000000e+00 : bf16
    %89 = vector.broadcast %cst_33 : bf16 to vector<32x32xbf16>
    %90 = arith.maximumf %88, %89 : vector<32x32xbf16>
    %91 = vector.broadcast %82 : vector<1x1xbf16> to vector<16x32xbf16>
    %92 = arith.mulf %13, %91 : vector<16x32xbf16>
    %93 = vector.broadcast %84 : vector<1x1xbf16> to vector<16x32xbf16>
    %94 = arith.addf %92, %93 : vector<16x32xbf16>
    %cst_34 = arith.constant 0.000000e+00 : bf16
    %95 = vector.broadcast %cst_34 : bf16 to vector<16x32xbf16>
    %96 = arith.maximumf %94, %95 : vector<16x32xbf16>
    %97 = arith.extf %90 : vector<32x32xbf16> to vector<32x32xf32>
    %cst_35 = arith.constant dense<0.000000e+00> : vector<32xf32>
    %98 = vector.multi_reduction <add>, %97, %cst_35 [1] : vector<32x32xf32> to vector<32xf32>
    %99 = vector.shape_cast %98 : vector<32xf32> to vector<32x1xf32>
    %c0_36 = arith.constant 0 : index
    %c1_37 = arith.constant 1 : index
    %100 = vector.load %arg13[%c0_36, %c1_37] : memref<48x16xf32, #tpu.memory_space<vmem>>, vector<32x1xf32>
    tpu.vector_store %arg13[%c0_36, %c1_37], %99 {strides = array<i32>} : memref<48x16xf32, #tpu.memory_space<vmem>>, vector<32x1xf32>,
    %101 = arith.extf %96 : vector<16x32xbf16> to vector<16x32xf32>
    %cst_38 = arith.constant dense<0.000000e+00> : vector<16xf32>
    %102 = vector.multi_reduction <add>, %101, %cst_38 [1] : vector<16x32xf32> to vector<16xf32>
    %103 = vector.shape_cast %102 : vector<16xf32> to vector<16x1xf32>
    %c32_39 = arith.constant 32 : index
    %c1_40 = arith.constant 1 : index
    %104 = vector.load %arg13[%c32_39, %c1_40] : memref<48x16xf32, #tpu.memory_space<vmem>>, vector<16x1xf32>
    tpu.vector_store %arg13[%c32_39, %c1_40], %103 {strides = array<i32>} : memref<48x16xf32, #tpu.memory_space<vmem>>, vector<16x1xf32>,
    %105 = vector.extract_strided_slice %53 {offsets = [2, 0], sizes = [1, 1], strides = [1, 1]} : vector<16x1xf32> to vector<1x1xf32>
    %106 = arith.truncf %105 : vector<1x1xf32> to vector<1x1xbf16>
    %107 = vector.extract_strided_slice %56 {offsets = [2, 0], sizes = [1, 1], strides = [1, 1]} : vector<16x1xf32> to vector<1x1xf32>
    %108 = arith.truncf %107 : vector<1x1xf32> to vector<1x1xbf16>
    %109 = vector.broadcast %106 : vector<1x1xbf16> to vector<32x32xbf16>
    %110 = arith.mulf %12, %109 : vector<32x32xbf16>
    %111 = vector.broadcast %108 : vector<1x1xbf16> to vector<32x32xbf16>
    %112 = arith.addf %110, %111 : vector<32x32xbf16>
    %cst_41 = arith.constant 0.000000e+00 : bf16
    %113 = vector.broadcast %cst_41 : bf16 to vector<32x32xbf16>
    %114 = arith.maximumf %112, %113 : vector<32x32xbf16>
    %115 = vector.broadcast %106 : vector<1x1xbf16> to vector<16x32xbf16>
    %116 = arith.mulf %13, %115 : vector<16x32xbf16>
    %117 = vector.broadcast %108 : vector<1x1xbf16> to vector<16x32xbf16>
    %118 = arith.addf %116, %117 : vector<16x32xbf16>
    %cst_42 = arith.constant 0.000000e+00 : bf16
    %119 = vector.broadcast %cst_42 : bf16 to vector<16x32xbf16>
    %120 = arith.maximumf %118, %119 : vector<16x32xbf16>
    %121 = arith.extf %114 : vector<32x32xbf16> to vector<32x32xf32>
    %cst_43 = arith.constant dense<0.000000e+00> : vector<32xf32>
    %122 = vector.multi_reduction <add>, %121, %cst_43 [1] : vector<32x32xf32> to vector<32xf32>
    %123 = vector.shape_cast %122 : vector<32xf32> to vector<32x1xf32>
    %c0_44 = arith.constant 0 : index
    %c2_45 = arith.constant 2 : index
    %124 = vector.load %arg13[%c0_44, %c2_45] : memref<48x16xf32, #tpu.memory_space<vmem>>, vector<32x1xf32>
    tpu.vector_store %arg13[%c0_44, %c2_45], %123 {strides = array<i32>} : memref<48x16xf32, #tpu.memory_space<vmem>>, vector<32x1xf32>,
    %125 = arith.extf %120 : vector<16x32xbf16> to vector<16x32xf32>
    %cst_46 = arith.constant dense<0.000000e+00> : vector<16xf32>
    %126 = vector.multi_reduction <add>, %125, %cst_46 [1] : vector<16x32xf32> to vector<16xf32>
    %127 = vector.shape_cast %126 : vector<16xf32> to vector<16x1xf32>
    %c32_47 = arith.constant 32 : index
    %c2_48 = arith.constant 2 : index
    %128 = vector.load %arg13[%c32_47, %c2_48] : memref<48x16xf32, #tpu.memory_space<vmem>>, vector<16x1xf32>
    tpu.vector_store %arg13[%c32_47, %c2_48], %127 {strides = array<i32>} : memref<48x16xf32, #tpu.memory_space<vmem>>, vector<16x1xf32>,
    %129 = vector.extract_strided_slice %53 {offsets = [3, 0], sizes = [1, 1], strides = [1, 1]} : vector<16x1xf32> to vector<1x1xf32>
    %130 = arith.truncf %129 : vector<1x1xf32> to vector<1x1xbf16>
    %131 = vector.extract_strided_slice %56 {offsets = [3, 0], sizes = [1, 1], strides = [1, 1]} : vector<16x1xf32> to vector<1x1xf32>
    %132 = arith.truncf %131 : vector<1x1xf32> to vector<1x1xbf16>
    %133 = vector.broadcast %130 : vector<1x1xbf16> to vector<32x32xbf16>
    %134 = arith.mulf %12, %133 : vector<32x32xbf16>
    %135 = vector.broadcast %132 : vector<1x1xbf16> to vector<32x32xbf16>
    %136 = arith.addf %134, %135 : vector<32x32xbf16>
    %cst_49 = arith.constant 0.000000e+00 : bf16
    %137 = vector.broadcast %cst_49 : bf16 to vector<32x32xbf16>
    %138 = arith.maximumf %136, %137 : vector<32x32xbf16>
    %139 = vector.broadcast %130 : vector<1x1xbf16> to vector<16x32xbf16>
    %140 = arith.mulf %13, %139 : vector<16x32xbf16>
    %141 = vector.broadcast %132 : vector<1x1xbf16> to vector<16x32xbf16>
    %142 = arith.addf %140, %141 : vector<16x32xbf16>
    %cst_50 = arith.constant 0.000000e+00 : bf16
    %143 = vector.broadcast %cst_50 : bf16 to vector<16x32xbf16>
    %144 = arith.maximumf %142, %143 : vector<16x32xbf16>
    %145 = arith.extf %138 : vector<32x32xbf16> to vector<32x32xf32>
    %cst_51 = arith.constant dense<0.000000e+00> : vector<32xf32>
    %146 = vector.multi_reduction <add>, %145, %cst_51 [1] : vector<32x32xf32> to vector<32xf32>
    %147 = vector.shape_cast %146 : vector<32xf32> to vector<32x1xf32>
    %c0_52 = arith.constant 0 : index
    %c3 = arith.constant 3 : index
    %148 = vector.load %arg13[%c0_52, %c3] : memref<48x16xf32, #tpu.memory_space<vmem>>, vector<32x1xf32>
    tpu.vector_store %arg13[%c0_52, %c3], %147 {strides = array<i32>} : memref<48x16xf32, #tpu.memory_space<vmem>>, vector<32x1xf32>,
    %149 = arith.extf %144 : vector<16x32xbf16> to vector<16x32xf32>
    %cst_53 = arith.constant dense<0.000000e+00> : vector<16xf32>
    %150 = vector.multi_reduction <add>, %149, %cst_53 [1] : vector<16x32xf32> to vector<16xf32>
    %151 = vector.shape_cast %150 : vector<16xf32> to vector<16x1xf32>
    %c32_54 = arith.constant 32 : index
    %c3_55 = arith.constant 3 : index
    %152 = vector.load %arg13[%c32_54, %c3_55] : memref<48x16xf32, #tpu.memory_space<vmem>>, vector<16x1xf32>
    tpu.vector_store %arg13[%c32_54, %c3_55], %151 {strides = array<i32>} : memref<48x16xf32, #tpu.memory_space<vmem>>, vector<16x1xf32>,
    %153 = vector.extract_strided_slice %53 {offsets = [4, 0], sizes = [1, 1], strides = [1, 1]} : vector<16x1xf32> to vector<1x1xf32>
    %154 = arith.truncf %153 : vector<1x1xf32> to vector<1x1xbf16>
    %155 = vector.extract_strided_slice %56 {offsets = [4, 0], sizes = [1, 1], strides = [1, 1]} : vector<16x1xf32> to vector<1x1xf32>
    %156 = arith.truncf %155 : vector<1x1xf32> to vector<1x1xbf16>
    %157 = vector.broadcast %154 : vector<1x1xbf16> to vector<32x32xbf16>
    %158 = arith.mulf %12, %157 : vector<32x32xbf16>
    %159 = vector.broadcast %156 : vector<1x1xbf16> to vector<32x32xbf16>
    %160 = arith.addf %158, %159 : vector<32x32xbf16>
    %cst_56 = arith.constant 0.000000e+00 : bf16
    %161 = vector.broadcast %cst_56 : bf16 to vector<32x32xbf16>
    %162 = arith.maximumf %160, %161 : vector<32x32xbf16>
    %163 = vector.broadcast %154 : vector<1x1xbf16> to vector<16x32xbf16>
    %164 = arith.mulf %13, %163 : vector<16x32xbf16>
    %165 = vector.broadcast %156 : vector<1x1xbf16> to vector<16x32xbf16>
    %166 = arith.addf %164, %165 : vector<16x32xbf16>
    %cst_57 = arith.constant 0.000000e+00 : bf16
    %167 = vector.broadcast %cst_57 : bf16 to vector<16x32xbf16>
    %168 = arith.maximumf %166, %167 : vector<16x32xbf16>
    %169 = arith.extf %162 : vector<32x32xbf16> to vector<32x32xf32>
    %cst_58 = arith.constant dense<0.000000e+00> : vector<32xf32>
    %170 = vector.multi_reduction <add>, %169, %cst_58 [1] : vector<32x32xf32> to vector<32xf32>
    %171 = vector.shape_cast %170 : vector<32xf32> to vector<32x1xf32>
    %c0_59 = arith.constant 0 : index
    %c4 = arith.constant 4 : index
    %172 = vector.load %arg13[%c0_59, %c4] : memref<48x16xf32, #tpu.memory_space<vmem>>, vector<32x1xf32>
    tpu.vector_store %arg13[%c0_59, %c4], %171 {strides = array<i32>} : memref<48x16xf32, #tpu.memory_space<vmem>>, vector<32x1xf32>,
    %173 = arith.extf %168 : vector<16x32xbf16> to vector<16x32xf32>
    %cst_60 = arith.constant dense<0.000000e+00> : vector<16xf32>
    %174 = vector.multi_reduction <add>, %173, %cst_60 [1] : vector<16x32xf32> to vector<16xf32>
    %175 = vector.shape_cast %174 : vector<16xf32> to vector<16x1xf32>
    %c32_61 = arith.constant 32 : index
    %c4_62 = arith.constant 4 : index
    %176 = vector.load %arg13[%c32_61, %c4_62] : memref<48x16xf32, #tpu.memory_space<vmem>>, vector<16x1xf32>
    tpu.vector_store %arg13[%c32_61, %c4_62], %175 {strides = array<i32>} : memref<48x16xf32, #tpu.memory_space<vmem>>, vector<16x1xf32>,
    %177 = vector.extract_strided_slice %53 {offsets = [5, 0], sizes = [1, 1], strides = [1, 1]} : vector<16x1xf32> to vector<1x1xf32>
    %178 = arith.truncf %177 : vector<1x1xf32> to vector<1x1xbf16>
    %179 = vector.extract_strided_slice %56 {offsets = [5, 0], sizes = [1, 1], strides = [1, 1]} : vector<16x1xf32> to vector<1x1xf32>
    %180 = arith.truncf %179 : vector<1x1xf32> to vector<1x1xbf16>
    %181 = vector.broadcast %178 : vector<1x1xbf16> to vector<32x32xbf16>
    %182 = arith.mulf %12, %181 : vector<32x32xbf16>
    %183 = vector.broadcast %180 : vector<1x1xbf16> to vector<32x32xbf16>
    %184 = arith.addf %182, %183 : vector<32x32xbf16>
    %cst_63 = arith.constant 0.000000e+00 : bf16
    %185 = vector.broadcast %cst_63 : bf16 to vector<32x32xbf16>
    %186 = arith.maximumf %184, %185 : vector<32x32xbf16>
    %187 = vector.broadcast %178 : vector<1x1xbf16> to vector<16x32xbf16>
    %188 = arith.mulf %13, %187 : vector<16x32xbf16>
    %189 = vector.broadcast %180 : vector<1x1xbf16> to vector<16x32xbf16>
    %190 = arith.addf %188, %189 : vector<16x32xbf16>
    %cst_64 = arith.constant 0.000000e+00 : bf16
    %191 = vector.broadcast %cst_64 : bf16 to vector<16x32xbf16>
    %192 = arith.maximumf %190, %191 : vector<16x32xbf16>
    %193 = arith.extf %186 : vector<32x32xbf16> to vector<32x32xf32>
    %cst_65 = arith.constant dense<0.000000e+00> : vector<32xf32>
    %194 = vector.multi_reduction <add>, %193, %cst_65 [1] : vector<32x32xf32> to vector<32xf32>
    %195 = vector.shape_cast %194 : vector<32xf32> to vector<32x1xf32>
    %c0_66 = arith.constant 0 : index
    %c5 = arith.constant 5 : index
    %196 = vector.load %arg13[%c0_66, %c5] : memref<48x16xf32, #tpu.memory_space<vmem>>, vector<32x1xf32>
    tpu.vector_store %arg13[%c0_66, %c5], %195 {strides = array<i32>} : memref<48x16xf32, #tpu.memory_space<vmem>>, vector<32x1xf32>,
    %197 = arith.extf %192 : vector<16x32xbf16> to vector<16x32xf32>
    %cst_67 = arith.constant dense<0.000000e+00> : vector<16xf32>
    %198 = vector.multi_reduction <add>, %197, %cst_67 [1] : vector<16x32xf32> to vector<16xf32>
    %199 = vector.shape_cast %198 : vector<16xf32> to vector<16x1xf32>
    %c32_68 = arith.constant 32 : index
    %c5_69 = arith.constant 5 : index
    %200 = vector.load %arg13[%c32_68, %c5_69] : memref<48x16xf32, #tpu.memory_space<vmem>>, vector<16x1xf32>
    tpu.vector_store %arg13[%c32_68, %c5_69], %199 {strides = array<i32>} : memref<48x16xf32, #tpu.memory_space<vmem>>, vector<16x1xf32>,
    %201 = vector.extract_strided_slice %53 {offsets = [6, 0], sizes = [1, 1], strides = [1, 1]} : vector<16x1xf32> to vector<1x1xf32>
    %202 = arith.truncf %201 : vector<1x1xf32> to vector<1x1xbf16>
    %203 = vector.extract_strided_slice %56 {offsets = [6, 0], sizes = [1, 1], strides = [1, 1]} : vector<16x1xf32> to vector<1x1xf32>
    %204 = arith.truncf %203 : vector<1x1xf32> to vector<1x1xbf16>
    %205 = vector.broadcast %202 : vector<1x1xbf16> to vector<32x32xbf16>
    %206 = arith.mulf %12, %205 : vector<32x32xbf16>
    %207 = vector.broadcast %204 : vector<1x1xbf16> to vector<32x32xbf16>
    %208 = arith.addf %206, %207 : vector<32x32xbf16>
    %cst_70 = arith.constant 0.000000e+00 : bf16
    %209 = vector.broadcast %cst_70 : bf16 to vector<32x32xbf16>
    %210 = arith.maximumf %208, %209 : vector<32x32xbf16>
    %211 = vector.broadcast %202 : vector<1x1xbf16> to vector<16x32xbf16>
    %212 = arith.mulf %13, %211 : vector<16x32xbf16>
    %213 = vector.broadcast %204 : vector<1x1xbf16> to vector<16x32xbf16>
    %214 = arith.addf %212, %213 : vector<16x32xbf16>
    %cst_71 = arith.constant 0.000000e+00 : bf16
    %215 = vector.broadcast %cst_71 : bf16 to vector<16x32xbf16>
    %216 = arith.maximumf %214, %215 : vector<16x32xbf16>
    %217 = arith.extf %210 : vector<32x32xbf16> to vector<32x32xf32>
    %cst_72 = arith.constant dense<0.000000e+00> : vector<32xf32>
    %218 = vector.multi_reduction <add>, %217, %cst_72 [1] : vector<32x32xf32> to vector<32xf32>
    %219 = vector.shape_cast %218 : vector<32xf32> to vector<32x1xf32>
    %c0_73 = arith.constant 0 : index
    %c6 = arith.constant 6 : index
    %220 = vector.load %arg13[%c0_73, %c6] : memref<48x16xf32, #tpu.memory_space<vmem>>, vector<32x1xf32>
    tpu.vector_store %arg13[%c0_73, %c6], %219 {strides = array<i32>} : memref<48x16xf32, #tpu.memory_space<vmem>>, vector<32x1xf32>,
    %221 = arith.extf %216 : vector<16x32xbf16> to vector<16x32xf32>
    %cst_74 = arith.constant dense<0.000000e+00> : vector<16xf32>
    %222 = vector.multi_reduction <add>, %221, %cst_74 [1] : vector<16x32xf32> to vector<16xf32>
    %223 = vector.shape_cast %222 : vector<16xf32> to vector<16x1xf32>
    %c32_75 = arith.constant 32 : index
    %c6_76 = arith.constant 6 : index
    %224 = vector.load %arg13[%c32_75, %c6_76] : memref<48x16xf32, #tpu.memory_space<vmem>>, vector<16x1xf32>
    tpu.vector_store %arg13[%c32_75, %c6_76], %223 {strides = array<i32>} : memref<48x16xf32, #tpu.memory_space<vmem>>, vector<16x1xf32>,
    %225 = vector.extract_strided_slice %53 {offsets = [7, 0], sizes = [1, 1], strides = [1, 1]} : vector<16x1xf32> to vector<1x1xf32>
    %226 = arith.truncf %225 : vector<1x1xf32> to vector<1x1xbf16>
    %227 = vector.extract_strided_slice %56 {offsets = [7, 0], sizes = [1, 1], strides = [1, 1]} : vector<16x1xf32> to vector<1x1xf32>
    %228 = arith.truncf %227 : vector<1x1xf32> to vector<1x1xbf16>
    %229 = vector.broadcast %226 : vector<1x1xbf16> to vector<32x32xbf16>
    %230 = arith.mulf %12, %229 : vector<32x32xbf16>
    %231 = vector.broadcast %228 : vector<1x1xbf16> to vector<32x32xbf16>
    %232 = arith.addf %230, %231 : vector<32x32xbf16>
    %cst_77 = arith.constant 0.000000e+00 : bf16
    %233 = vector.broadcast %cst_77 : bf16 to vector<32x32xbf16>
    %234 = arith.maximumf %232, %233 : vector<32x32xbf16>
    %235 = vector.broadcast %226 : vector<1x1xbf16> to vector<16x32xbf16>
    %236 = arith.mulf %13, %235 : vector<16x32xbf16>
    %237 = vector.broadcast %228 : vector<1x1xbf16> to vector<16x32xbf16>
    %238 = arith.addf %236, %237 : vector<16x32xbf16>
    %cst_78 = arith.constant 0.000000e+00 : bf16
    %239 = vector.broadcast %cst_78 : bf16 to vector<16x32xbf16>
    %240 = arith.maximumf %238, %239 : vector<16x32xbf16>
    %241 = arith.extf %234 : vector<32x32xbf16> to vector<32x32xf32>
    %cst_79 = arith.constant dense<0.000000e+00> : vector<32xf32>
    %242 = vector.multi_reduction <add>, %241, %cst_79 [1] : vector<32x32xf32> to vector<32xf32>
    %243 = vector.shape_cast %242 : vector<32xf32> to vector<32x1xf32>
    %c0_80 = arith.constant 0 : index
    %c7 = arith.constant 7 : index
    %244 = vector.load %arg13[%c0_80, %c7] : memref<48x16xf32, #tpu.memory_space<vmem>>, vector<32x1xf32>
    tpu.vector_store %arg13[%c0_80, %c7], %243 {strides = array<i32>} : memref<48x16xf32, #tpu.memory_space<vmem>>, vector<32x1xf32>,
    %245 = arith.extf %240 : vector<16x32xbf16> to vector<16x32xf32>
    %cst_81 = arith.constant dense<0.000000e+00> : vector<16xf32>
    %246 = vector.multi_reduction <add>, %245, %cst_81 [1] : vector<16x32xf32> to vector<16xf32>
    %247 = vector.shape_cast %246 : vector<16xf32> to vector<16x1xf32>
    %c32_82 = arith.constant 32 : index
    %c7_83 = arith.constant 7 : index
    %248 = vector.load %arg13[%c32_82, %c7_83] : memref<48x16xf32, #tpu.memory_space<vmem>>, vector<16x1xf32>
    tpu.vector_store %arg13[%c32_82, %c7_83], %247 {strides = array<i32>} : memref<48x16xf32, #tpu.memory_space<vmem>>, vector<16x1xf32>,
    %249 = vector.extract_strided_slice %53 {offsets = [8, 0], sizes = [1, 1], strides = [1, 1]} : vector<16x1xf32> to vector<1x1xf32>
    %250 = arith.truncf %249 : vector<1x1xf32> to vector<1x1xbf16>
    %251 = vector.extract_strided_slice %56 {offsets = [8, 0], sizes = [1, 1], strides = [1, 1]} : vector<16x1xf32> to vector<1x1xf32>
    %252 = arith.truncf %251 : vector<1x1xf32> to vector<1x1xbf16>
    %253 = vector.broadcast %250 : vector<1x1xbf16> to vector<32x32xbf16>
    %254 = arith.mulf %12, %253 : vector<32x32xbf16>
    %255 = vector.broadcast %252 : vector<1x1xbf16> to vector<32x32xbf16>
    %256 = arith.addf %254, %255 : vector<32x32xbf16>
    %cst_84 = arith.constant 0.000000e+00 : bf16
    %257 = vector.broadcast %cst_84 : bf16 to vector<32x32xbf16>
    %258 = arith.maximumf %256, %257 : vector<32x32xbf16>
    %259 = vector.broadcast %250 : vector<1x1xbf16> to vector<16x32xbf16>
    %260 = arith.mulf %13, %259 : vector<16x32xbf16>
    %261 = vector.broadcast %252 : vector<1x1xbf16> to vector<16x32xbf16>
    %262 = arith.addf %260, %261 : vector<16x32xbf16>
    %cst_85 = arith.constant 0.000000e+00 : bf16
    %263 = vector.broadcast %cst_85 : bf16 to vector<16x32xbf16>
    %264 = arith.maximumf %262, %263 : vector<16x32xbf16>
    %265 = arith.extf %258 : vector<32x32xbf16> to vector<32x32xf32>
    %cst_86 = arith.constant dense<0.000000e+00> : vector<32xf32>
    %266 = vector.multi_reduction <add>, %265, %cst_86 [1] : vector<32x32xf32> to vector<32xf32>
    %267 = vector.shape_cast %266 : vector<32xf32> to vector<32x1xf32>
    %c0_87 = arith.constant 0 : index
    %c8 = arith.constant 8 : index
    %268 = vector.load %arg13[%c0_87, %c8] : memref<48x16xf32, #tpu.memory_space<vmem>>, vector<32x1xf32>
    tpu.vector_store %arg13[%c0_87, %c8], %267 {strides = array<i32>} : memref<48x16xf32, #tpu.memory_space<vmem>>, vector<32x1xf32>,
    %269 = arith.extf %264 : vector<16x32xbf16> to vector<16x32xf32>
    %cst_88 = arith.constant dense<0.000000e+00> : vector<16xf32>
    %270 = vector.multi_reduction <add>, %269, %cst_88 [1] : vector<16x32xf32> to vector<16xf32>
    %271 = vector.shape_cast %270 : vector<16xf32> to vector<16x1xf32>
    %c32_89 = arith.constant 32 : index
    %c8_90 = arith.constant 8 : index
    %272 = vector.load %arg13[%c32_89, %c8_90] : memref<48x16xf32, #tpu.memory_space<vmem>>, vector<16x1xf32>
    tpu.vector_store %arg13[%c32_89, %c8_90], %271 {strides = array<i32>} : memref<48x16xf32, #tpu.memory_space<vmem>>, vector<16x1xf32>,
    %273 = vector.extract_strided_slice %53 {offsets = [9, 0], sizes = [1, 1], strides = [1, 1]} : vector<16x1xf32> to vector<1x1xf32>
    %274 = arith.truncf %273 : vector<1x1xf32> to vector<1x1xbf16>
    %275 = vector.extract_strided_slice %56 {offsets = [9, 0], sizes = [1, 1], strides = [1, 1]} : vector<16x1xf32> to vector<1x1xf32>
    %276 = arith.truncf %275 : vector<1x1xf32> to vector<1x1xbf16>
    %277 = vector.broadcast %274 : vector<1x1xbf16> to vector<32x32xbf16>
    %278 = arith.mulf %12, %277 : vector<32x32xbf16>
    %279 = vector.broadcast %276 : vector<1x1xbf16> to vector<32x32xbf16>
    %280 = arith.addf %278, %279 : vector<32x32xbf16>
    %cst_91 = arith.constant 0.000000e+00 : bf16
    %281 = vector.broadcast %cst_91 : bf16 to vector<32x32xbf16>
    %282 = arith.maximumf %280, %281 : vector<32x32xbf16>
    %283 = vector.broadcast %274 : vector<1x1xbf16> to vector<16x32xbf16>
    %284 = arith.mulf %13, %283 : vector<16x32xbf16>
    %285 = vector.broadcast %276 : vector<1x1xbf16> to vector<16x32xbf16>
    %286 = arith.addf %284, %285 : vector<16x32xbf16>
    %cst_92 = arith.constant 0.000000e+00 : bf16
    %287 = vector.broadcast %cst_92 : bf16 to vector<16x32xbf16>
    %288 = arith.maximumf %286, %287 : vector<16x32xbf16>
    %289 = arith.extf %282 : vector<32x32xbf16> to vector<32x32xf32>
    %cst_93 = arith.constant dense<0.000000e+00> : vector<32xf32>
    %290 = vector.multi_reduction <add>, %289, %cst_93 [1] : vector<32x32xf32> to vector<32xf32>
    %291 = vector.shape_cast %290 : vector<32xf32> to vector<32x1xf32>
    %c0_94 = arith.constant 0 : index
    %c9 = arith.constant 9 : index
    %292 = vector.load %arg13[%c0_94, %c9] : memref<48x16xf32, #tpu.memory_space<vmem>>, vector<32x1xf32>
    tpu.vector_store %arg13[%c0_94, %c9], %291 {strides = array<i32>} : memref<48x16xf32, #tpu.memory_space<vmem>>, vector<32x1xf32>,
    %293 = arith.extf %288 : vector<16x32xbf16> to vector<16x32xf32>
    %cst_95 = arith.constant dense<0.000000e+00> : vector<16xf32>
    %294 = vector.multi_reduction <add>, %293, %cst_95 [1] : vector<16x32xf32> to vector<16xf32>
    %295 = vector.shape_cast %294 : vector<16xf32> to vector<16x1xf32>
    %c32_96 = arith.constant 32 : index
    %c9_97 = arith.constant 9 : index
    %296 = vector.load %arg13[%c32_96, %c9_97] : memref<48x16xf32, #tpu.memory_space<vmem>>, vector<16x1xf32>
    tpu.vector_store %arg13[%c32_96, %c9_97], %295 {strides = array<i32>} : memref<48x16xf32, #tpu.memory_space<vmem>>, vector<16x1xf32>,
    %297 = vector.extract_strided_slice %53 {offsets = [10, 0], sizes = [1, 1], strides = [1, 1]} : vector<16x1xf32> to vector<1x1xf32>
    %298 = arith.truncf %297 : vector<1x1xf32> to vector<1x1xbf16>
    %299 = vector.extract_strided_slice %56 {offsets = [10, 0], sizes = [1, 1], strides = [1, 1]} : vector<16x1xf32> to vector<1x1xf32>
    %300 = arith.truncf %299 : vector<1x1xf32> to vector<1x1xbf16>
    %301 = vector.broadcast %298 : vector<1x1xbf16> to vector<32x32xbf16>
    %302 = arith.mulf %12, %301 : vector<32x32xbf16>
    %303 = vector.broadcast %300 : vector<1x1xbf16> to vector<32x32xbf16>
    %304 = arith.addf %302, %303 : vector<32x32xbf16>
    %cst_98 = arith.constant 0.000000e+00 : bf16
    %305 = vector.broadcast %cst_98 : bf16 to vector<32x32xbf16>
    %306 = arith.maximumf %304, %305 : vector<32x32xbf16>
    %307 = vector.broadcast %298 : vector<1x1xbf16> to vector<16x32xbf16>
    %308 = arith.mulf %13, %307 : vector<16x32xbf16>
    %309 = vector.broadcast %300 : vector<1x1xbf16> to vector<16x32xbf16>
    %310 = arith.addf %308, %309 : vector<16x32xbf16>
    %cst_99 = arith.constant 0.000000e+00 : bf16
    %311 = vector.broadcast %cst_99 : bf16 to vector<16x32xbf16>
    %312 = arith.maximumf %310, %311 : vector<16x32xbf16>
    %313 = arith.extf %306 : vector<32x32xbf16> to vector<32x32xf32>
    %cst_100 = arith.constant dense<0.000000e+00> : vector<32xf32>
    %314 = vector.multi_reduction <add>, %313, %cst_100 [1] : vector<32x32xf32> to vector<32xf32>
    %315 = vector.shape_cast %314 : vector<32xf32> to vector<32x1xf32>
    %c0_101 = arith.constant 0 : index
    %c10 = arith.constant 10 : index
    %316 = vector.load %arg13[%c0_101, %c10] : memref<48x16xf32, #tpu.memory_space<vmem>>, vector<32x1xf32>
    tpu.vector_store %arg13[%c0_101, %c10], %315 {strides = array<i32>} : memref<48x16xf32, #tpu.memory_space<vmem>>, vector<32x1xf32>,
    %317 = arith.extf %312 : vector<16x32xbf16> to vector<16x32xf32>
    %cst_102 = arith.constant dense<0.000000e+00> : vector<16xf32>
    %318 = vector.multi_reduction <add>, %317, %cst_102 [1] : vector<16x32xf32> to vector<16xf32>
    %319 = vector.shape_cast %318 : vector<16xf32> to vector<16x1xf32>
    %c32_103 = arith.constant 32 : index
    %c10_104 = arith.constant 10 : index
    %320 = vector.load %arg13[%c32_103, %c10_104] : memref<48x16xf32, #tpu.memory_space<vmem>>, vector<16x1xf32>
    tpu.vector_store %arg13[%c32_103, %c10_104], %319 {strides = array<i32>} : memref<48x16xf32, #tpu.memory_space<vmem>>, vector<16x1xf32>,
    %321 = vector.extract_strided_slice %53 {offsets = [11, 0], sizes = [1, 1], strides = [1, 1]} : vector<16x1xf32> to vector<1x1xf32>
    %322 = arith.truncf %321 : vector<1x1xf32> to vector<1x1xbf16>
    %323 = vector.extract_strided_slice %56 {offsets = [11, 0], sizes = [1, 1], strides = [1, 1]} : vector<16x1xf32> to vector<1x1xf32>
    %324 = arith.truncf %323 : vector<1x1xf32> to vector<1x1xbf16>
    %325 = vector.broadcast %322 : vector<1x1xbf16> to vector<32x32xbf16>
    %326 = arith.mulf %12, %325 : vector<32x32xbf16>
    %327 = vector.broadcast %324 : vector<1x1xbf16> to vector<32x32xbf16>
    %328 = arith.addf %326, %327 : vector<32x32xbf16>
    %cst_105 = arith.constant 0.000000e+00 : bf16
    %329 = vector.broadcast %cst_105 : bf16 to vector<32x32xbf16>
    %330 = arith.maximumf %328, %329 : vector<32x32xbf16>
    %331 = vector.broadcast %322 : vector<1x1xbf16> to vector<16x32xbf16>
    %332 = arith.mulf %13, %331 : vector<16x32xbf16>
    %333 = vector.broadcast %324 : vector<1x1xbf16> to vector<16x32xbf16>
    %334 = arith.addf %332, %333 : vector<16x32xbf16>
    %cst_106 = arith.constant 0.000000e+00 : bf16
    %335 = vector.broadcast %cst_106 : bf16 to vector<16x32xbf16>
    %336 = arith.maximumf %334, %335 : vector<16x32xbf16>
    %337 = arith.extf %330 : vector<32x32xbf16> to vector<32x32xf32>
    %cst_107 = arith.constant dense<0.000000e+00> : vector<32xf32>
    %338 = vector.multi_reduction <add>, %337, %cst_107 [1] : vector<32x32xf32> to vector<32xf32>
    %339 = vector.shape_cast %338 : vector<32xf32> to vector<32x1xf32>
    %c0_108 = arith.constant 0 : index
    %c11 = arith.constant 11 : index
    %340 = vector.load %arg13[%c0_108, %c11] : memref<48x16xf32, #tpu.memory_space<vmem>>, vector<32x1xf32>
    tpu.vector_store %arg13[%c0_108, %c11], %339 {strides = array<i32>} : memref<48x16xf32, #tpu.memory_space<vmem>>, vector<32x1xf32>,
    %341 = arith.extf %336 : vector<16x32xbf16> to vector<16x32xf32>
    %cst_109 = arith.constant dense<0.000000e+00> : vector<16xf32>
    %342 = vector.multi_reduction <add>, %341, %cst_109 [1] : vector<16x32xf32> to vector<16xf32>
    %343 = vector.shape_cast %342 : vector<16xf32> to vector<16x1xf32>
    %c32_110 = arith.constant 32 : index
    %c11_111 = arith.constant 11 : index
    %344 = vector.load %arg13[%c32_110, %c11_111] : memref<48x16xf32, #tpu.memory_space<vmem>>, vector<16x1xf32>
    tpu.vector_store %arg13[%c32_110, %c11_111], %343 {strides = array<i32>} : memref<48x16xf32, #tpu.memory_space<vmem>>, vector<16x1xf32>,
    %345 = vector.extract_strided_slice %53 {offsets = [12, 0], sizes = [1, 1], strides = [1, 1]} : vector<16x1xf32> to vector<1x1xf32>
    %346 = arith.truncf %345 : vector<1x1xf32> to vector<1x1xbf16>
    %347 = vector.extract_strided_slice %56 {offsets = [12, 0], sizes = [1, 1], strides = [1, 1]} : vector<16x1xf32> to vector<1x1xf32>
    %348 = arith.truncf %347 : vector<1x1xf32> to vector<1x1xbf16>
    %349 = vector.broadcast %346 : vector<1x1xbf16> to vector<32x32xbf16>
    %350 = arith.mulf %12, %349 : vector<32x32xbf16>
    %351 = vector.broadcast %348 : vector<1x1xbf16> to vector<32x32xbf16>
    %352 = arith.addf %350, %351 : vector<32x32xbf16>
    %cst_112 = arith.constant 0.000000e+00 : bf16
    %353 = vector.broadcast %cst_112 : bf16 to vector<32x32xbf16>
    %354 = arith.maximumf %352, %353 : vector<32x32xbf16>
    %355 = vector.broadcast %346 : vector<1x1xbf16> to vector<16x32xbf16>
    %356 = arith.mulf %13, %355 : vector<16x32xbf16>
    %357 = vector.broadcast %348 : vector<1x1xbf16> to vector<16x32xbf16>
    %358 = arith.addf %356, %357 : vector<16x32xbf16>
    %cst_113 = arith.constant 0.000000e+00 : bf16
    %359 = vector.broadcast %cst_113 : bf16 to vector<16x32xbf16>
    %360 = arith.maximumf %358, %359 : vector<16x32xbf16>
    %361 = arith.extf %354 : vector<32x32xbf16> to vector<32x32xf32>
    %cst_114 = arith.constant dense<0.000000e+00> : vector<32xf32>
    %362 = vector.multi_reduction <add>, %361, %cst_114 [1] : vector<32x32xf32> to vector<32xf32>
    %363 = vector.shape_cast %362 : vector<32xf32> to vector<32x1xf32>
    %c0_115 = arith.constant 0 : index
    %c12 = arith.constant 12 : index
    %364 = vector.load %arg13[%c0_115, %c12] : memref<48x16xf32, #tpu.memory_space<vmem>>, vector<32x1xf32>
    tpu.vector_store %arg13[%c0_115, %c12], %363 {strides = array<i32>} : memref<48x16xf32, #tpu.memory_space<vmem>>, vector<32x1xf32>,
    %365 = arith.extf %360 : vector<16x32xbf16> to vector<16x32xf32>
    %cst_116 = arith.constant dense<0.000000e+00> : vector<16xf32>
    %366 = vector.multi_reduction <add>, %365, %cst_116 [1] : vector<16x32xf32> to vector<16xf32>
    %367 = vector.shape_cast %366 : vector<16xf32> to vector<16x1xf32>
    %c32_117 = arith.constant 32 : index
    %c12_118 = arith.constant 12 : index
    %368 = vector.load %arg13[%c32_117, %c12_118] : memref<48x16xf32, #tpu.memory_space<vmem>>, vector<16x1xf32>
    tpu.vector_store %arg13[%c32_117, %c12_118], %367 {strides = array<i32>} : memref<48x16xf32, #tpu.memory_space<vmem>>, vector<16x1xf32>,
    %369 = vector.extract_strided_slice %53 {offsets = [13, 0], sizes = [1, 1], strides = [1, 1]} : vector<16x1xf32> to vector<1x1xf32>
    %370 = arith.truncf %369 : vector<1x1xf32> to vector<1x1xbf16>
    %371 = vector.extract_strided_slice %56 {offsets = [13, 0], sizes = [1, 1], strides = [1, 1]} : vector<16x1xf32> to vector<1x1xf32>
    %372 = arith.truncf %371 : vector<1x1xf32> to vector<1x1xbf16>
    %373 = vector.broadcast %370 : vector<1x1xbf16> to vector<32x32xbf16>
    %374 = arith.mulf %12, %373 : vector<32x32xbf16>
    %375 = vector.broadcast %372 : vector<1x1xbf16> to vector<32x32xbf16>
    %376 = arith.addf %374, %375 : vector<32x32xbf16>
    %cst_119 = arith.constant 0.000000e+00 : bf16
    %377 = vector.broadcast %cst_119 : bf16 to vector<32x32xbf16>
    %378 = arith.maximumf %376, %377 : vector<32x32xbf16>
    %379 = vector.broadcast %370 : vector<1x1xbf16> to vector<16x32xbf16>
    %380 = arith.mulf %13, %379 : vector<16x32xbf16>
    %381 = vector.broadcast %372 : vector<1x1xbf16> to vector<16x32xbf16>
    %382 = arith.addf %380, %381 : vector<16x32xbf16>
    %cst_120 = arith.constant 0.000000e+00 : bf16
    %383 = vector.broadcast %cst_120 : bf16 to vector<16x32xbf16>
    %384 = arith.maximumf %382, %383 : vector<16x32xbf16>
    %385 = arith.extf %378 : vector<32x32xbf16> to vector<32x32xf32>
    %cst_121 = arith.constant dense<0.000000e+00> : vector<32xf32>
    %386 = vector.multi_reduction <add>, %385, %cst_121 [1] : vector<32x32xf32> to vector<32xf32>
    %387 = vector.shape_cast %386 : vector<32xf32> to vector<32x1xf32>
    %c0_122 = arith.constant 0 : index
    %c13 = arith.constant 13 : index
    %388 = vector.load %arg13[%c0_122, %c13] : memref<48x16xf32, #tpu.memory_space<vmem>>, vector<32x1xf32>
    tpu.vector_store %arg13[%c0_122, %c13], %387 {strides = array<i32>} : memref<48x16xf32, #tpu.memory_space<vmem>>, vector<32x1xf32>,
    %389 = arith.extf %384 : vector<16x32xbf16> to vector<16x32xf32>
    %cst_123 = arith.constant dense<0.000000e+00> : vector<16xf32>
    %390 = vector.multi_reduction <add>, %389, %cst_123 [1] : vector<16x32xf32> to vector<16xf32>
    %391 = vector.shape_cast %390 : vector<16xf32> to vector<16x1xf32>
    %c32_124 = arith.constant 32 : index
    %c13_125 = arith.constant 13 : index
    %392 = vector.load %arg13[%c32_124, %c13_125] : memref<48x16xf32, #tpu.memory_space<vmem>>, vector<16x1xf32>
    tpu.vector_store %arg13[%c32_124, %c13_125], %391 {strides = array<i32>} : memref<48x16xf32, #tpu.memory_space<vmem>>, vector<16x1xf32>,
    %393 = vector.extract_strided_slice %53 {offsets = [14, 0], sizes = [1, 1], strides = [1, 1]} : vector<16x1xf32> to vector<1x1xf32>
    %394 = arith.truncf %393 : vector<1x1xf32> to vector<1x1xbf16>
    %395 = vector.extract_strided_slice %56 {offsets = [14, 0], sizes = [1, 1], strides = [1, 1]} : vector<16x1xf32> to vector<1x1xf32>
    %396 = arith.truncf %395 : vector<1x1xf32> to vector<1x1xbf16>
    %397 = vector.broadcast %394 : vector<1x1xbf16> to vector<32x32xbf16>
    %398 = arith.mulf %12, %397 : vector<32x32xbf16>
    %399 = vector.broadcast %396 : vector<1x1xbf16> to vector<32x32xbf16>
    %400 = arith.addf %398, %399 : vector<32x32xbf16>
    %cst_126 = arith.constant 0.000000e+00 : bf16
    %401 = vector.broadcast %cst_126 : bf16 to vector<32x32xbf16>
    %402 = arith.maximumf %400, %401 : vector<32x32xbf16>
    %403 = vector.broadcast %394 : vector<1x1xbf16> to vector<16x32xbf16>
    %404 = arith.mulf %13, %403 : vector<16x32xbf16>
    %405 = vector.broadcast %396 : vector<1x1xbf16> to vector<16x32xbf16>
    %406 = arith.addf %404, %405 : vector<16x32xbf16>
    %cst_127 = arith.constant 0.000000e+00 : bf16
    %407 = vector.broadcast %cst_127 : bf16 to vector<16x32xbf16>
    %408 = arith.maximumf %406, %407 : vector<16x32xbf16>
    %409 = arith.extf %402 : vector<32x32xbf16> to vector<32x32xf32>
    %cst_128 = arith.constant dense<0.000000e+00> : vector<32xf32>
    %410 = vector.multi_reduction <add>, %409, %cst_128 [1] : vector<32x32xf32> to vector<32xf32>
    %411 = vector.shape_cast %410 : vector<32xf32> to vector<32x1xf32>
    %c0_129 = arith.constant 0 : index
    %c14 = arith.constant 14 : index
    %412 = vector.load %arg13[%c0_129, %c14] : memref<48x16xf32, #tpu.memory_space<vmem>>, vector<32x1xf32>
    tpu.vector_store %arg13[%c0_129, %c14], %411 {strides = array<i32>} : memref<48x16xf32, #tpu.memory_space<vmem>>, vector<32x1xf32>,
    %413 = arith.extf %408 : vector<16x32xbf16> to vector<16x32xf32>
    %cst_130 = arith.constant dense<0.000000e+00> : vector<16xf32>
    %414 = vector.multi_reduction <add>, %413, %cst_130 [1] : vector<16x32xf32> to vector<16xf32>
    %415 = vector.shape_cast %414 : vector<16xf32> to vector<16x1xf32>
    %c32_131 = arith.constant 32 : index
    %c14_132 = arith.constant 14 : index
    %416 = vector.load %arg13[%c32_131, %c14_132] : memref<48x16xf32, #tpu.memory_space<vmem>>, vector<16x1xf32>
    tpu.vector_store %arg13[%c32_131, %c14_132], %415 {strides = array<i32>} : memref<48x16xf32, #tpu.memory_space<vmem>>, vector<16x1xf32>,
    %417 = vector.extract_strided_slice %53 {offsets = [15, 0], sizes = [1, 1], strides = [1, 1]} : vector<16x1xf32> to vector<1x1xf32>
    %418 = arith.truncf %417 : vector<1x1xf32> to vector<1x1xbf16>
    %419 = vector.extract_strided_slice %56 {offsets = [15, 0], sizes = [1, 1], strides = [1, 1]} : vector<16x1xf32> to vector<1x1xf32>
    %420 = arith.truncf %419 : vector<1x1xf32> to vector<1x1xbf16>
    %421 = vector.broadcast %418 : vector<1x1xbf16> to vector<32x32xbf16>
    %422 = arith.mulf %12, %421 : vector<32x32xbf16>
    %423 = vector.broadcast %420 : vector<1x1xbf16> to vector<32x32xbf16>
    %424 = arith.addf %422, %423 : vector<32x32xbf16>
    %cst_133 = arith.constant 0.000000e+00 : bf16
    %425 = vector.broadcast %cst_133 : bf16 to vector<32x32xbf16>
    %426 = arith.maximumf %424, %425 : vector<32x32xbf16>
    %427 = vector.broadcast %418 : vector<1x1xbf16> to vector<16x32xbf16>
    %428 = arith.mulf %13, %427 : vector<16x32xbf16>
    %429 = vector.broadcast %420 : vector<1x1xbf16> to vector<16x32xbf16>
    %430 = arith.addf %428, %429 : vector<16x32xbf16>
    %cst_134 = arith.constant 0.000000e+00 : bf16
    %431 = vector.broadcast %cst_134 : bf16 to vector<16x32xbf16>
    %432 = arith.maximumf %430, %431 : vector<16x32xbf16>
    %433 = arith.extf %426 : vector<32x32xbf16> to vector<32x32xf32>
    %cst_135 = arith.constant dense<0.000000e+00> : vector<32xf32>
    %434 = vector.multi_reduction <add>, %433, %cst_135 [1] : vector<32x32xf32> to vector<32xf32>
    %435 = vector.shape_cast %434 : vector<32xf32> to vector<32x1xf32>
    %c0_136 = arith.constant 0 : index
    %c15 = arith.constant 15 : index
    %436 = vector.load %arg13[%c0_136, %c15] : memref<48x16xf32, #tpu.memory_space<vmem>>, vector<32x1xf32>
    tpu.vector_store %arg13[%c0_136, %c15], %435 {strides = array<i32>} : memref<48x16xf32, #tpu.memory_space<vmem>>, vector<32x1xf32>,
    %437 = arith.extf %432 : vector<16x32xbf16> to vector<16x32xf32>
    %cst_137 = arith.constant dense<0.000000e+00> : vector<16xf32>
    %438 = vector.multi_reduction <add>, %437, %cst_137 [1] : vector<16x32xf32> to vector<16xf32>
    %439 = vector.shape_cast %438 : vector<16xf32> to vector<16x1xf32>
    %c32_138 = arith.constant 32 : index
    %c15_139 = arith.constant 15 : index
    %440 = vector.load %arg13[%c32_138, %c15_139] : memref<48x16xf32, #tpu.memory_space<vmem>>, vector<16x1xf32>
    tpu.vector_store %arg13[%c32_138, %c15_139], %439 {strides = array<i32>} : memref<48x16xf32, #tpu.memory_space<vmem>>, vector<16x1xf32>,
    %c0_140 = arith.constant 0 : index
    %c0_141 = arith.constant 0 : index
    %441 = vector.load %arg7[%c0_140, %c0_141] : memref<2x48xf32, #tpu.memory_space<vmem>>, vector<2x48xf32>
    %c0_142 = arith.constant 0 : index
    %c0_143 = arith.constant 0 : index
    %442 = vector.load %arg13[%c0_142, %c0_143] : memref<48x16xf32, #tpu.memory_space<vmem>>, vector<48x16xf32>
    %cst_144 = arith.constant dense<0.000000e+00> : vector<2x16xf32>
    %443 = tpu.matmul %441, %442, %cst_144 {dimension_numbers = #tpu.dot_dimension_numbers<[1], [0], [0], [1], [0, 0, 1, 1], [], []>} : vector<2x48xf32>, vector<48x16xf32>, vector<2x16xf32> -> vector<2x16xf32>
    %cst_145 = arith.constant 0.00130208337 : f32
    %444 = vector.broadcast %cst_145 : f32 to vector<2x16xf32>
    %445 = arith.mulf %443, %444 : vector<2x16xf32>
    %c0_146 = arith.constant 0 : index
    %c0_147 = arith.constant 0 : index
    %446 = vector.load %arg8[%c0_146, %c0_147] : memref<16x32xf32, #tpu.memory_space<vmem>>, vector<16x32xf32>
    %cst_148 = arith.constant dense<0.000000e+00> : vector<2x32xf32>
    %447 = tpu.matmul %445, %446, %cst_148 {dimension_numbers = #tpu.dot_dimension_numbers<[1], [0], [0], [1], [0, 0, 1, 1], [], []>} : vector<2x16xf32>, vector<16x32xf32>, vector<2x32xf32> -> vector<2x32xf32>
    %c0_149 = arith.constant 0 : index
    %c0_150 = arith.constant 0 : index
    %448 = vector.load %arg9[%c0_149, %c0_150] : memref<1x32xf32, #tpu.memory_space<vmem>>, vector<1x32xf32>
    %449 = vector.broadcast %448 : vector<1x32xf32> to vector<2x32xf32>
    %450 = arith.addf %447, %449 : vector<2x32xf32>
    %451 = math.tanh %450 : vector<2x32xf32>
    %c0_151 = arith.constant 0 : index
    %c0_152 = arith.constant 0 : index
    %452 = vector.load %arg10[%c0_151, %c0_152] : memref<32x6xf32, #tpu.memory_space<vmem>>, vector<32x6xf32>
    %cst_153 = arith.constant dense<0.000000e+00> : vector<2x6xf32>
    %453 = tpu.matmul %451, %452, %cst_153 {dimension_numbers = #tpu.dot_dimension_numbers<[1], [0], [0], [1], [0, 0, 1, 1], [], []>} : vector<2x32xf32>, vector<32x6xf32>, vector<2x6xf32> -> vector<2x6xf32>
    %c0_154 = arith.constant 0 : index
    %c0_155 = arith.constant 0 : index
    %454 = vector.load %arg11[%c0_154, %c0_155] : memref<1x6xf32, #tpu.memory_space<vmem>>, vector<1x6xf32>
    %455 = vector.broadcast %454 : vector<1x6xf32> to vector<2x6xf32>
    %456 = arith.addf %453, %455 : vector<2x6xf32>
    %c0_156 = arith.constant 0 : index
    %c0_157 = arith.constant 0 : index
    %457 = vector.load %arg12[%c0_156, %c0_157] : memref<2x6xf32, #tpu.memory_space<vmem>>, vector<2x6xf32>
    tpu.vector_store %arg12[%c0_156, %c0_157], %456 {strides = array<i32>} : memref<2x6xf32, #tpu.memory_space<vmem>>, vector<2x6xf32>,
    return
  }
}

</mosaic_0001>

<llo_original>
// kernel: _lambda_.1
$region0: #{_lambda_.1}
  #allocation0 [shape = 'u32[]', space=smem, size = 0x4, offset = 0x4, fixed_abs, tag = 'smem constant byte address 0x4 - core index']
  #allocation1 [shape = 'u32[144,128]{1,0:T(1,128)}', space=vmem, size = 0x12000, scoped, tag = 'internal scratch']
  #allocation2 [shape = 'f32[48,16]{1,0:T(8,128)}', space=vmem, size = 0x6000, scoped, tag = 'scratch operand']
  %s0 = inlined_call_operand.vmem [shape: bf16[32,48], index: 0, kind: input, shape index: {}]
  %s1 = inlined_call_operand.vmem [shape: bf16[16,4], index: 1, kind: input, shape index: {}]
  %s2 = inlined_call_operand.vmem [shape: bf16[48,32], index: 2, kind: input, shape index: {}]
  %s3 = inlined_call_operand.vmem [shape: f32[1,32], index: 3, kind: input, shape index: {}]
  %s4 = inlined_call_operand.vmem [shape: bf16[4,32], index: 4, kind: input, shape index: {}]
  %s5 = inlined_call_operand.vmem [shape: f32[1,32], index: 5, kind: input, shape index: {}]
  %s6 = inlined_call_operand.vmem [shape: f32[3,16,1], index: 6, kind: input, shape index: {}]
  %s7 = inlined_call_operand.vmem [shape: f32[2,48], index: 7, kind: input, shape index: {}]
  %s8 = inlined_call_operand.vmem [shape: f32[16,32], index: 8, kind: input, shape index: {}]
  %s9 = inlined_call_operand.vmem [shape: f32[1,32], index: 9, kind: input, shape index: {}]
  %s10 = inlined_call_operand.vmem [shape: f32[32,6], index: 10, kind: input, shape index: {}]
  %s11 = inlined_call_operand.vmem [shape: f32[1,6], index: 11, kind: input, shape index: {}]
  %s12 = inlined_call_operand.hbm [shape: f32[2,6], index: 12, kind: output, shape index: {}]
  %s13 = sld [smem:[#allocation0]]
  $region58: #{_lambda_.1} parent=0
    _
  %s15 = ssub.s32 1, %s13
  %s16 = scalar_select 0, %s15, %s13
  $region1: #{_lambda_.1} parent=0
    #allocation3 [shape = 'u8[1024]{0}', space=vmem, size = 0x400, scoped, tag = 'output window, operand 0, single buffered']
    #allocation4 [shape = 's32[1]{0}', space=sflag, size = 0x4, scoped, tag = 'scoped memory for _lambda_.1']
    %17 = vsyncpa [#allocation4], 0
    // Predicated region
    $region2: #{_lambda_.1} parent=1 // pred_check
      _
    $region3: #{_lambda_.1} parent=1 // pred_check_branch
      %19 = sbr.rel (0) target = $region5
    $region4: #{_lambda_.1} parent=1 // pred_region
      _
    $region5: #{_lambda_.1} parent=1 // pred_fallthru
      _
    // Predicated region
    $region6: #{_lambda_.1} parent=1 // pred_check
      _
    $region7: #{_lambda_.1} parent=1 // pred_check_branch
      %21 = sbr.rel (0) target = $region9
    $region8: #{_lambda_.1} parent=1 // pred_region
      _
    $region9: #{_lambda_.1} parent=1 // pred_fallthru
      _
    // Predicated region
    $region10: #{_lambda_.1} parent=1 // pred_check
      _
    $region11: #{_lambda_.1} parent=1 // pred_check_branch
      %23 = sbr.rel (0) target = $region13
    $region12: #{_lambda_.1} parent=1 // pred_region
      _
    $region13: #{_lambda_.1} parent=1 // pred_fallthru
      _
    // Predicated region
    $region14: #{_lambda_.1} parent=1 // pred_check
      _
    $region15: #{_lambda_.1} parent=1 // pred_check_branch
      %25 = sbr.rel (0) target = $region17
    $region16: #{_lambda_.1} parent=1 // pred_region
      _
    $region17: #{_lambda_.1} parent=1 // pred_fallthru
      _
    // Predicated region
    $region18: #{_lambda_.1} parent=1 // pred_check
      _
    $region19: #{_lambda_.1} parent=1 // pred_check_branch
      %27 = sbr.rel (0) target = $region21
    $region20: #{_lambda_.1} parent=1 // pred_region
      _
    $region21: #{_lambda_.1} parent=1 // pred_fallthru
      _
    // Predicated region
    $region22: #{_lambda_.1} parent=1 // pred_check
      _
    $region23: #{_lambda_.1} parent=1 // pred_check_branch
      %29 = sbr.rel (0) target = $region25
    $region24: #{_lambda_.1} parent=1 // pred_region
      _
    $region25: #{_lambda_.1} parent=1 // pred_fallthru
      _
    // Predicated region
    $region26: #{_lambda_.1} parent=1 // pred_check
      _
    $region27: #{_lambda_.1} parent=1 // pred_check_branch
      %31 = sbr.rel (0) target = $region29
    $region28: #{_lambda_.1} parent=1 // pred_region
      _
    $region29: #{_lambda_.1} parent=1 // pred_fallthru
      _
    // Predicated region
    $region30: #{_lambda_.1} parent=1 // pred_check
      _
    $region31: #{_lambda_.1} parent=1 // pred_check_branch
      %33 = sbr.rel (0) target = $region33
    $region32: #{_lambda_.1} parent=1 // pred_region
      _
    $region33: #{_lambda_.1} parent=1 // pred_fallthru
      _
    // Predicated region
    $region34: #{_lambda_.1} parent=1 // pred_check
      _
    $region35: #{_lambda_.1} parent=1 // pred_check_branch
      %35 = sbr.rel (0) target = $region37
    $region36: #{_lambda_.1} parent=1 // pred_region
      _
    $region37: #{_lambda_.1} parent=1 // pred_fallthru
      _
    // Predicated region
    $region38: #{_lambda_.1} parent=1 // pred_check
      _
    $region39: #{_lambda_.1} parent=1 // pred_check_branch
      %37 = sbr.rel (0) target = $region41
    $region40: #{_lambda_.1} parent=1 // pred_region
      _
    $region41: #{_lambda_.1} parent=1 // pred_fallthru
      _
    // Predicated region
    $region42: #{_lambda_.1} parent=1 // pred_check
      _
    $region43: #{_lambda_.1} parent=1 // pred_check_branch
      %39 = sbr.rel (0) target = $region45
    $region44: #{_lambda_.1} parent=1 // pred_region
      _
    $region45: #{_lambda_.1} parent=1 // pred_fallthru
      _
    // Predicated region
    $region46: #{_lambda_.1} parent=1 // pred_check
      _
    $region47: #{_lambda_.1} parent=1 // pred_check_branch
      %41 = sbr.rel (0) target = $region49
    $region48: #{_lambda_.1} parent=1 // pred_region
      _
    $region49: #{_lambda_.1} parent=1 // pred_fallthru
      _
    %v43 = vld [vmem:[%s0] sm:$0xf]
    %v44 = vld [vmem:[%s0 + $0x4] sm:$0xf]
    %v45 = vld [vmem:[%s0 + $0x8] sm:$0xf]
    %v46 = vld [vmem:[%s0 + $0xc] sm:$0xf]
    %v47 = vld [vmem:[%s2] sm:$0xf]
    %v48 = vld [vmem:[%s2 + $0x4] sm:$0xf]
    %v49 = vld [vmem:[%s2 + $0x8] sm:$0xf]
    %v50 = vld [vmem:[%s2 + $0xc] sm:$0xf]
    %v51 = vld [vmem:[%s2 + $0x10] sm:$0xf]
    %v52 = vld [vmem:[%s2 + $0x14] sm:$0xf]
    %v53 = vld [vmem:[%s3] sm:$0x1]
    %v55 = vlaneseq
    %v56 = vshrl.u32 %v55, 7
    %v57 = vsub.s32 0, %v56
    %v58 = vrot.slane %v53, %v57
    %v64 = vunpack.c.l.b16 %v43
    %v65 = vunpack.c.l.b16 %v44
    %v66 = vunpack.c.l.b16 %v45
    %v67 = vunpack.c.l.b16 %v46
    %v68 = vpack.c.b16 %v65, %v64
    %v69 = vpack.c.b16 %v67, %v66
    %v76 = vunpack.c.l.b16 %v47
    %v77 = vunpack.c.l.b16 %v48
    %v78 = vunpack.c.l.b16 %v49
    %v79 = vunpack.c.l.b16 %v50
    %v80 = vunpack.c.l.b16 %v51
    %v81 = vunpack.c.l.b16 %v52
    %v82 = vpack.c.b16 %v77, %v76
    %v83 = vpack.c.b16 %v79, %v78
    %v84 = vpack.c.b16 %v81, %v80
    %vm88 = vcmask 392192
    %v90 = vsel %vm88, %v68, 0
    %v93 = vsel %vm88, %v69, 0
    %95 = vmatprep.subr.bf16.mxu0 0
    %96 = vmatpush1.bf16.msra.mxu0 0
    %97 = vmatprep.subr.bf16.mxu0 0
    %98 = vmatpush1.bf16.msra.mxu0 0
    %99 = vmatprep.subr.bf16.mxu0 0
    %100 = vmatpush1.bf16.msra.mxu0 0
    %101 = vmatprep.subr.bf16.mxu0 0
    %102 = vmatpush1.bf16.msra.mxu0 0
    %103 = vmatprep.subr.bf16.mxu0 0
    %104 = vmatpush1.bf16.msra.mxu0 0
    %105 = vmatprep.subr.bf16.mxu0 0
    %106 = vmatpush1.bf16.msra.mxu0 %v84
    %107 = vmatprep.subr.bf16.mxu0 0
    %108 = vmatpush1.bf16.msra.mxu0 %v83
    %109 = vmatprep.subr.bf16.mxu0 0
    %110 = vmatpush1.bf16.msra.mxu0 %v82
    %111 = vmatprep.subr.bf16.mxu0 0
    %112 = vmatpush2.bf16.msra.mxu0 0
    %113 = vmatprep.subr.bf16.mxu0 0
    %114 = vmatpush2.bf16.msra.mxu0 0
    %115 = vmatprep.subr.bf16.mxu0 0
    %116 = vmatpush2.bf16.msra.mxu0 0
    %117 = vmatprep.subr.bf16.mxu0 0
    %118 = vmatpush2.bf16.msra.mxu0 0
    %119 = vmatprep.subr.bf16.mxu0 0
    %120 = vmatpush2.bf16.msra.mxu0 0
    %121 = vmatprep.subr.bf16.mxu0 0
    %122 = vmatpush2.bf16.msra.mxu0 0
    %123 = vmatprep.subr.bf16.mxu0 0
    %124 = vmatpush2.bf16.msra.mxu0 0
    %125 = vmatprep.subr.bf16.mxu0 0
    %126 = vmatpush2.bf16.msra.mxu0 0
    %127 = vmatprep.mubr.bf16.mxu0 0
    %128 = vmatmul.mubr.bf16.gmra.mxu0 %v90
    %v129 = vpop.f32.mrf.mxu0
    %v130 = vadd.f32 %v58, %v129
    %v131 = vpop.f32.mrf.mxu0
    %v132 = vpop.f32.mrf.mxu0
    %v133 = vadd.f32 %v58, %v132
    %v134 = vpop.f32.mrf.mxu0
    %135 = vmatprep.mubr.bf16.mxu0 0
    %136 = vmatmul.mubr.bf16.gmra.mxu0 %v93
    %v137 = vpop.f32.mrf.mxu0
    %v138 = vadd.f32 %v58, %v137
    %v139 = vpop.f32.mrf.mxu0
    %v140 = vpop.f32.mrf.mxu0
    %v141 = vadd.f32 %v58, %v140
    %v142 = vpop.f32.mrf.mxu0
    %143 = vdwg.mxu0
    %v144 = vld [vmem:[%s1] sm:$0xf]
    %v145 = vld [vmem:[%s1 + $0x4] sm:$0xf]
    %v146 = vld [vmem:[%s4] sm:$0x3]
    %v147 = vld [vmem:[%s5] sm:$0x1]
    %v149 = vlaneseq
    %v150 = vshrl.u32 %v149, 7
    %v151 = vsub.s32 0, %v150
    %v152 = vrot.slane %v147, %v151
    %v156 = vunpack.c.l.b16 %v144
    %v157 = vunpack.c.l.b16 %v145
    %v158 = vpack.c.b16 %v157, %v156
    %vm159 = vcmask 31744
    %v161 = vsel %vm159, %v158, 0
    %vm163 = vcmask 1041408
    %v165 = vsel %vm163, %v146, 0
    %167 = vmatprep.subr.bf16.mxu0 0
    %168 = vmatpush1.bf16.msra.mxu0 0
    %169 = vmatprep.subr.bf16.mxu0 0
    %170 = vmatpush1.bf16.msra.mxu0 0
    %171 = vmatprep.subr.bf16.mxu0 0
    %172 = vmatpush1.bf16.msra.mxu0 0
    %173 = vmatprep.subr.bf16.mxu0 0
    %174 = vmatpush1.bf16.msra.mxu0 0
    %175 = vmatprep.subr.bf16.mxu0 0
    %176 = vmatpush1.bf16.msra.mxu0 0
    %177 = vmatprep.subr.bf16.mxu0 0
    %178 = vmatpush1.bf16.msra.mxu0 0
    %179 = vmatprep.subr.bf16.mxu0 0
    %180 = vmatpush1.bf16.msra.mxu0 0
    %181 = vmatprep.subr.bf16.mxu0 0
    %182 = vmatpush1.bf16.msra.mxu0 %v165
    %183 = vmatprep.subr.bf16.mxu0 0
    %184 = vmatpush2.bf16.msra.mxu0 0
    %185 = vmatprep.subr.bf16.mxu0 0
    %186 = vmatpush2.bf16.msra.mxu0 0
    %187 = vmatprep.subr.bf16.mxu0 0
    %188 = vmatpush2.bf16.msra.mxu0 0
    %189 = vmatprep.subr.bf16.mxu0 0
    %190 = vmatpush2.bf16.msra.mxu0 0
    %191 = vmatprep.subr.bf16.mxu0 0
    %192 = vmatpush2.bf16.msra.mxu0 0
    %193 = vmatprep.subr.bf16.mxu0 0
    %194 = vmatpush2.bf16.msra.mxu0 0
    %195 = vmatprep.subr.bf16.mxu0 0
    %196 = vmatpush2.bf16.msra.mxu0 0
    %197 = vmatprep.subr.bf16.mxu0 0
    %198 = vmatpush2.bf16.msra.mxu0 0
    %199 = vmatprep.mubr.bf16.mxu0 0
    %200 = vmatmul.mubr.bf16.gmra.mxu0 %v161
    %v201 = vpop.f32.mrf.mxu0
    %v202 = vadd.f32 %v152, %v201
    %v203 = vpop.f32.mrf.mxu0
    %v204 = vpop.f32.mrf.mxu0
    %v205 = vadd.f32 %v152, %v204
    %v206 = vpop.f32.mrf.mxu0
    %207 = vdwg.mxu0
    %v208 = vpack.c.bf16 %v133, %v130
    %v209 = vpack.c.bf16 %v141, %v138
    %v210 = vpack.c.bf16 %v205, %v202
    %v211 = vunpack.c.l.bf16 %v208
    %v212 = vunpack.c.h.bf16 %v208
    %v213 = vunpack.c.l.bf16 %v209
    %v214 = vunpack.c.h.bf16 %v209
    %v215 = vunpack.c.l.bf16 %v210
    %v216 = vunpack.c.h.bf16 %v210
    %vm217 = vcmask 261120
    %v218 = vsel %vm217, %v211, 0.0
    %v219 = vsel %vm217, %v212, 0.0
    %v220 = vadd.f32 %v218, %v219
    %v221 = vsel %vm217, %v213, 0.0
    %v222 = vadd.f32 %v220, %v221
    %v223 = vsel %vm217, %v214, 0.0
    %v224 = vadd.f32 %v222, %v223
    %225 = vadd.xlane.f32.xlu0 %v224
    %v226 = vpop.xlane.xlu0 %225
    %v227 = vrot.slane %v226, 4
    %v228 = vadd.f32 %v226, %v227
    %v229 = vrot.slane %v228, 2
    %v230 = vadd.f32 %v228, %v229
    %v231 = vrot.slane %v230, 1
    %v232 = vadd.f32 %v230, %v231
    %s233 = vtos %v232
    %v234 = vsel %vm217, %v215, 0.0
    %v235 = vsel %vm217, %v216, 0.0
    %v236 = vadd.f32 %v234, %v235
    %237 = vadd.xlane.f32.xlu0 %v236
    %v238 = vpop.xlane.xlu0 %237
    %v239 = vrot.slane %v238, 4
    %v240 = vadd.f32 %v238, %v239
    %v241 = vrot.slane %v240, 2
    %v242 = vadd.f32 %v240, %v241
    %v243 = vrot.slane %v242, 1
    %v244 = vadd.f32 %v242, %v243
    %s245 = vtos %v244
    %s246 = sadd.f32 %s233, %s245
    %v247 = vrcp.pop 1536.0
    %s248 = vtos %v247
    %s249 = smul.f32 %s246, %s248
    %v250 = vstv %s249
    %v251 = vsub.f32 %v211, %v250
    %v252 = vsub.f32 %v212, %v250
    %v253 = vsub.f32 %v213, %v250
    %v254 = vsub.f32 %v214, %v250
    %v255 = vsub.f32 %v215, %v250
    %v256 = vsub.f32 %v216, %v250
    %v257 = vmul.f32 %v251, %v251
    %v258 = vmul.f32 %v252, %v252
    %v259 = vmul.f32 %v253, %v253
    %v260 = vmul.f32 %v254, %v254
    %v261 = vsel %vm217, %v257, 0.0
    %v262 = vsel %vm217, %v258, 0.0
    %v263 = vadd.f32 %v261, %v262
    %v264 = vsel %vm217, %v259, 0.0
    %v265 = vadd.f32 %v263, %v264
    %v266 = vsel %vm217, %v260, 0.0
    %v267 = vadd.f32 %v265, %v266
    %268 = vadd.xlane.f32.xlu0 %v267
    %v269 = vpop.xlane.xlu0 %268
    %v270 = vrot.slane %v269, 4
    %v271 = vadd.f32 %v269, %v270
    %v272 = vrot.slane %v271, 2
    %v273 = vadd.f32 %v271, %v272
    %v274 = vrot.slane %v273, 1
    %v275 = vadd.f32 %v273, %v274
    %s276 = vtos %v275
    %v277 = vmul.f32 %v255, %v255
    %v278 = vmul.f32 %v256, %v256
    %v279 = vsel %vm217, %v277, 0.0
    %v280 = vsel %vm217, %v278, 0.0
    %v281 = vadd.f32 %v279, %v280
    %282 = vadd.xlane.f32.xlu0 %v281
    %v283 = vpop.xlane.xlu0 %282
    %v284 = vrot.slane %v283, 4
    %v285 = vadd.f32 %v283, %v284
    %v286 = vrot.slane %v285, 2
    %v287 = vadd.f32 %v285, %v286
    %v288 = vrot.slane %v287, 1
    %v289 = vadd.f32 %v287, %v288
    %s290 = vtos %v289
    %s291 = sadd.f32 %s276, %s290
    %v292 = vrcp.pop 1536.0
    %s293 = vtos %v292
    %s294 = smul.f32 %s291, %s293
    %v295 = vld [vmem:[%s6] sm:$0xff]
    %v296 = vld [vmem:[%s6 + $0x8] sm:$0xff]
    %s297 = scalar_lea.vmem %s6, 16
    %v298 = vld [vmem:[%s297] sm:$0xff]
    %v299 = vld [vmem:[%s297 + $0x8] sm:$0xff]
    %s300 = scalar_lea.vmem %s6, 32
    %v301 = vld [vmem:[%s300] sm:$0xff]
    %v302 = vld [vmem:[%s300 + $0x8] sm:$0xff]
    %v303 = vstv %s294
    %v304 = vmul.f32 %v298, %v303
    %v305 = vmul.f32 %v299, %v303
    %v306 = vadd.f32 %v304, 1e-05
    %v307 = vadd.f32 %v305, 1e-05
    %v308 = vrsqrt.pop %v306
    %v309 = vrsqrt.pop %v307
    %v310 = vmul.f32 %v295, %v308
    %v311 = vmul.f32 %v296, %v309
    %v312 = vmul.f32 %v310, %v250
    %v313 = vmul.f32 %v311, %v250
    %v314 = vsub.f32 %v301, %v312
    %v315 = vsub.f32 %v302, %v313
    %v316 = vpack.c.bf16 %v310, %v310
    %v317 = vpack.c.bf16 %v314, %v314
    %s319 = vtos %v316
    %v320 = vstv %s319
    %v321 = vpack.i.b16 %v320, %v320
    %v323 = vmul.bf16 %v208, %v321
    %v324 = vmul.bf16 %v209, %v321
    %s326 = vtos %v317
    %v327 = vstv %s326
    %v328 = vpack.i.b16 %v327, %v327
    %v330 = vadd.bf16 %v323, %v328
    %v331 = vadd.bf16 %v324, %v328
    %v332 = vmax.bf16 %v330, 0
    %v333 = vmax.bf16 %v331, 0
    %v334 = vmul.bf16 %v210, %v321
    %v335 = vadd.bf16 %v334, %v328
    %v336 = vmax.bf16 %v335, 0
    %v337 = vunpack.c.l.bf16 %v332
    %v338 = vunpack.c.h.bf16 %v332
    %v339 = vunpack.c.l.bf16 %v333
    %v340 = vunpack.c.h.bf16 %v333
    %v341 = vsel %vm217, %v337, 0.0
    %342 = vadd.xlane.f32.xlu0 %v341
    %v343 = vpop.xlane.xlu0 %342
    %v344 = vsel %vm217, %v338, 0.0
    %345 = vadd.xlane.f32.xlu0 %v344
    %v346 = vpop.xlane.xlu0 %345
    %v347 = vsel %vm217, %v339, 0.0
    %348 = vadd.xlane.f32.xlu0 %v347
    %v349 = vpop.xlane.xlu0 %348
    %v350 = vsel %vm217, %v340, 0.0
    %351 = vadd.xlane.f32.xlu0 %v350
    %v352 = vpop.xlane.xlu0 %351
    %vm353 = vcmask 7168
    %354 = vst.msk [vmem:[#allocation2] sm:$0xff] %vm353, %v343
    %355 = vst.msk [vmem:[#allocation2 + $0x8] sm:$0xff] %vm353, %v346
    %356 = vst.msk [vmem:[#allocation2 + $0x10] sm:$0xff] %vm353, %v349
    %357 = vst.msk [vmem:[#allocation2 + $0x18] sm:$0xff] %vm353, %v352
    %v358 = vunpack.c.l.bf16 %v336
    %v359 = vunpack.c.h.bf16 %v336
    %v360 = vsel %vm217, %v358, 0.0
    %361 = vadd.xlane.f32.xlu0 %v360
    %v362 = vpop.xlane.xlu0 %361
    %v363 = vsel %vm217, %v359, 0.0
    %364 = vadd.xlane.f32.xlu0 %v363
    %v365 = vpop.xlane.xlu0 %364
    %366 = vst.msk [vmem:[#allocation2 + $0x20] sm:$0xff] %vm353, %v362
    %367 = vst.msk [vmem:[#allocation2 + $0x28] sm:$0xff] %vm353, %v365
    %v368 = vshrl.u32 %v316, 16
    %s371 = vtos %v368
    %v372 = vstv %s371
    %v373 = vpack.i.b16 %v372, %v372
    %v375 = vmul.bf16 %v208, %v373
    %v376 = vmul.bf16 %v209, %v373
    %v377 = vshrl.u32 %v317, 16
    %s380 = vtos %v377
    %v381 = vstv %s380
    %v382 = vpack.i.b16 %v381, %v381
    %v384 = vadd.bf16 %v375, %v382
    %v385 = vadd.bf16 %v376, %v382
    %v386 = vmax.bf16 %v384, 0
    %v387 = vmax.bf16 %v385, 0
    %v388 = vmul.bf16 %v210, %v373
    %v389 = vadd.bf16 %v388, %v382
    %v390 = vmax.bf16 %v389, 0
    %v391 = vunpack.c.l.bf16 %v386
    %v392 = vunpack.c.h.bf16 %v386
    %v393 = vunpack.c.l.bf16 %v387
    %v394 = vunpack.c.h.bf16 %v387
    %v395 = vsel %vm217, %v391, 0.0
    %396 = vadd.xlane.f32.xlu0 %v395
    %v397 = vpop.xlane.xlu0 %396
    %v398 = vsel %vm217, %v392, 0.0
    %399 = vadd.xlane.f32.xlu0 %v398
    %v400 = vpop.xlane.xlu0 %399
    %v401 = vsel %vm217, %v393, 0.0
    %402 = vadd.xlane.f32.xlu0 %v401
    %v403 = vpop.xlane.xlu0 %402
    %v404 = vsel %vm217, %v394, 0.0
    %405 = vadd.xlane.f32.xlu0 %v404
    %v406 = vpop.xlane.xlu0 %405
    %vm407 = vcmask 15368
    %408 = vst.msk [vmem:[#allocation2] sm:$0xff] %vm407, %v397
    %409 = vst.msk [vmem:[#allocation2 + $0x8] sm:$0xff] %vm407, %v400
    %410 = vst.msk [vmem:[#allocation2 + $0x10] sm:$0xff] %vm407, %v403
    %411 = vst.msk [vmem:[#allocation2 + $0x18] sm:$0xff] %vm407, %v406
    %v412 = vunpack.c.l.bf16 %v390
    %v413 = vunpack.c.h.bf16 %v390
    %v414 = vsel %vm217, %v412, 0.0
    %415 = vadd.xlane.f32.xlu0 %v414
    %v416 = vpop.xlane.xlu0 %415
    %v417 = vsel %vm217, %v413, 0.0
    %418 = vadd.xlane.f32.xlu0 %v417
    %v419 = vpop.xlane.xlu0 %418
    %420 = vst.msk [vmem:[#allocation2 + $0x20] sm:$0xff] %vm407, %v416
    %421 = vst.msk [vmem:[#allocation2 + $0x28] sm:$0xff] %vm407, %v419
    %v423 = vrot.slane %v316, 1
    %s425 = vtos %v423
    %v426 = vstv %s425
    %v427 = vpack.i.b16 %v426, %v426
    %v429 = vmul.bf16 %v208, %v427
    %v430 = vmul.bf16 %v209, %v427
    %v432 = vrot.slane %v317, 1
    %s434 = vtos %v432
    %v435 = vstv %s434
    %v436 = vpack.i.b16 %v435, %v435
    %v438 = vadd.bf16 %v429, %v436
    %v439 = vadd.bf16 %v430, %v436
    %v440 = vmax.bf16 %v438, 0
    %v441 = vmax.bf16 %v439, 0
    %v442 = vmul.bf16 %v210, %v427
    %v443 = vadd.bf16 %v442, %v436
    %v444 = vmax.bf16 %v443, 0
    %v445 = vunpack.c.l.bf16 %v440
    %v446 = vunpack.c.h.bf16 %v440
    %v447 = vunpack.c.l.bf16 %v441
    %v448 = vunpack.c.h.bf16 %v441
    %v449 = vsel %vm217, %v445, 0.0
    %450 = vadd.xlane.f32.xlu0 %v449
    %v451 = vpop.xlane.xlu0 %450
    %v452 = vsel %vm217, %v446, 0.0
    %453 = vadd.xlane.f32.xlu0 %v452
    %v454 = vpop.xlane.xlu0 %453
    %v455 = vsel %vm217, %v447, 0.0
    %456 = vadd.xlane.f32.xlu0 %v455
    %v457 = vpop.xlane.xlu0 %456
    %v458 = vsel %vm217, %v448, 0.0
    %459 = vadd.xlane.f32.xlu0 %v458
    %v460 = vpop.xlane.xlu0 %459
    %vm461 = vcmask 23568
    %462 = vst.msk [vmem:[#allocation2] sm:$0xff] %vm461, %v451
    %463 = vst.msk [vmem:[#allocation2 + $0x8] sm:$0xff] %vm461, %v454
    %464 = vst.msk [vmem:[#allocation2 + $0x10] sm:$0xff] %vm461, %v457
    %465 = vst.msk [vmem:[#allocation2 + $0x18] sm:$0xff] %vm461, %v460
    %v466 = vunpack.c.l.bf16 %v444
    %v467 = vunpack.c.h.bf16 %v444
    %v468 = vsel %vm217, %v466, 0.0
    %469 = vadd.xlane.f32.xlu0 %v468
    %v470 = vpop.xlane.xlu0 %469
    %v471 = vsel %vm217, %v467, 0.0
    %472 = vadd.xlane.f32.xlu0 %v471
    %v473 = vpop.xlane.xlu0 %472
    %474 = vst.msk [vmem:[#allocation2 + $0x20] sm:$0xff] %vm461, %v470
    %475 = vst.msk [vmem:[#allocation2 + $0x28] sm:$0xff] %vm461, %v473
    %v476 = vrot.slane %v368, 1
    %s478 = vtos %v476
    %v479 = vstv %s478
    %v480 = vpack.i.b16 %v479, %v479
    %v482 = vmul.bf16 %v208, %v480
    %v483 = vmul.bf16 %v209, %v480
    %v484 = vrot.slane %v377, 1
    %s486 = vtos %v484
    %v487 = vstv %s486
    %v488 = vpack.i.b16 %v487, %v487
    %v490 = vadd.bf16 %v482, %v488
    %v491 = vadd.bf16 %v483, %v488
    %v492 = vmax.bf16 %v490, 0
    %v493 = vmax.bf16 %v491, 0
    %v494 = vmul.bf16 %v210, %v480
    %v495 = vadd.bf16 %v494, %v488
    %v496 = vmax.bf16 %v495, 0
    %v497 = vunpack.c.l.bf16 %v492
    %v498 = vunpack.c.h.bf16 %v492
    %v499 = vunpack.c.l.bf16 %v493
    %v500 = vunpack.c.h.bf16 %v493
    %v501 = vsel %vm217, %v497, 0.0
    %502 = vadd.xlane.f32.xlu0 %v501
    %v503 = vpop.xlane.xlu0 %502
    %v504 = vsel %vm217, %v498, 0.0
    %505 = vadd.xlane.f32.xlu0 %v504
    %v506 = vpop.xlane.xlu0 %505
    %v507 = vsel %vm217, %v499, 0.0
    %508 = vadd.xlane.f32.xlu0 %v507
    %v509 = vpop.xlane.xlu0 %508
    %v510 = vsel %vm217, %v500, 0.0
    %511 = vadd.xlane.f32.xlu0 %v510
    %v512 = vpop.xlane.xlu0 %511
    %vm513 = vcmask 31768
    %514 = vst.msk [vmem:[#allocation2] sm:$0xff] %vm513, %v503
    %515 = vst.msk [vmem:[#allocation2 + $0x8] sm:$0xff] %vm513, %v506
    %516 = vst.msk [vmem:[#allocation2 + $0x10] sm:$0xff] %vm513, %v509
    %517 = vst.msk [vmem:[#allocation2 + $0x18] sm:$0xff] %vm513, %v512
    %v518 = vunpack.c.l.bf16 %v496
    %v519 = vunpack.c.h.bf16 %v496
    %v520 = vsel %vm217, %v518, 0.0
    %521 = vadd.xlane.f32.xlu0 %v520
    %v522 = vpop.xlane.xlu0 %521
    %v523 = vsel %vm217, %v519, 0.0
    %524 = vadd.xlane.f32.xlu0 %v523
    %v525 = vpop.xlane.xlu0 %524
    %526 = vst.msk [vmem:[#allocation2 + $0x20] sm:$0xff] %vm513, %v522
    %527 = vst.msk [vmem:[#allocation2 + $0x28] sm:$0xff] %vm513, %v525
    %v528 = vrot.slane %v316, 2
    %s530 = vtos %v528
    %v531 = vstv %s530
    %v532 = vpack.i.b16 %v531, %v531
    %v534 = vmul.bf16 %v208, %v532
    %v535 = vmul.bf16 %v209, %v532
    %v536 = vrot.slane %v317, 2
    %s538 = vtos %v536
    %v539 = vstv %s538
    %v540 = vpack.i.b16 %v539, %v539
    %v542 = vadd.bf16 %v534, %v540
    %v543 = vadd.bf16 %v535, %v540
    %v544 = vmax.bf16 %v542, 0
    %v545 = vmax.bf16 %v543, 0
    %v546 = vmul.bf16 %v210, %v532
    %v547 = vadd.bf16 %v546, %v540
    %v548 = vmax.bf16 %v547, 0
    %v549 = vunpack.c.l.bf16 %v544
    %v550 = vunpack.c.h.bf16 %v544
    %v551 = vunpack.c.l.bf16 %v545
    %v552 = vunpack.c.h.bf16 %v545
    %v553 = vsel %vm217, %v549, 0.0
    %554 = vadd.xlane.f32.xlu0 %v553
    %v555 = vpop.xlane.xlu0 %554
    %v556 = vsel %vm217, %v550, 0.0
    %557 = vadd.xlane.f32.xlu0 %v556
    %v558 = vpop.xlane.xlu0 %557
    %v559 = vsel %vm217, %v551, 0.0
    %560 = vadd.xlane.f32.xlu0 %v559
    %v561 = vpop.xlane.xlu0 %560
    %v562 = vsel %vm217, %v552, 0.0
    %563 = vadd.xlane.f32.xlu0 %v562
    %v564 = vpop.xlane.xlu0 %563
    %vm565 = vcmask 39968
    %566 = vst.msk [vmem:[#allocation2] sm:$0xff] %vm565, %v555
    %567 = vst.msk [vmem:[#allocation2 + $0x8] sm:$0xff] %vm565, %v558
    %568 = vst.msk [vmem:[#allocation2 + $0x10] sm:$0xff] %vm565, %v561
    %569 = vst.msk [vmem:[#allocation2 + $0x18] sm:$0xff] %vm565, %v564
    %v570 = vunpack.c.l.bf16 %v548
    %v571 = vunpack.c.h.bf16 %v548
    %v572 = vsel %vm217, %v570, 0.0
    %573 = vadd.xlane.f32.xlu0 %v572
    %v574 = vpop.xlane.xlu0 %573
    %v575 = vsel %vm217, %v571, 0.0
    %576 = vadd.xlane.f32.xlu0 %v575
    %v577 = vpop.xlane.xlu0 %576
    %578 = vst.msk [vmem:[#allocation2 + $0x20] sm:$0xff] %vm565, %v574
    %579 = vst.msk [vmem:[#allocation2 + $0x28] sm:$0xff] %vm565, %v577
    %v580 = vrot.slane %v368, 2
    %s582 = vtos %v580
    %v583 = vstv %s582
    %v584 = vpack.i.b16 %v583, %v583
    %v586 = vmul.bf16 %v208, %v584
    %v587 = vmul.bf16 %v209, %v584
    %v588 = vrot.slane %v377, 2
    %s590 = vtos %v588
    %v591 = vstv %s590
    %v592 = vpack.i.b16 %v591, %v591
    %v594 = vadd.bf16 %v586, %v592
    %v595 = vadd.bf16 %v587, %v592
    %v596 = vmax.bf16 %v594, 0
    %v597 = vmax.bf16 %v595, 0
    %v598 = vmul.bf16 %v210, %v584
    %v599 = vadd.bf16 %v598, %v592
    %v600 = vmax.bf16 %v599, 0
    %v601 = vunpack.c.l.bf16 %v596
    %v602 = vunpack.c.h.bf16 %v596
    %v603 = vunpack.c.l.bf16 %v597
    %v604 = vunpack.c.h.bf16 %v597
    %v605 = vsel %vm217, %v601, 0.0
    %606 = vadd.xlane.f32.xlu0 %v605
    %v607 = vpop.xlane.xlu0 %606
    %v608 = vsel %vm217, %v602, 0.0
    %609 = vadd.xlane.f32.xlu0 %v608
    %v610 = vpop.xlane.xlu0 %609
    %v611 = vsel %vm217, %v603, 0.0
    %612 = vadd.xlane.f32.xlu0 %v611
    %v613 = vpop.xlane.xlu0 %612
    %v614 = vsel %vm217, %v604, 0.0
    %615 = vadd.xlane.f32.xlu0 %v614
    %v616 = vpop.xlane.xlu0 %615
    %vm617 = vcmask 48168
    %618 = vst.msk [vmem:[#allocation2] sm:$0xff] %vm617, %v607
    %619 = vst.msk [vmem:[#allocation2 + $0x8] sm:$0xff] %vm617, %v610
    %620 = vst.msk [vmem:[#allocation2 + $0x10] sm:$0xff] %vm617, %v613
    %621 = vst.msk [vmem:[#allocation2 + $0x18] sm:$0xff] %vm617, %v616
    %v622 = vunpack.c.l.bf16 %v600
    %v623 = vunpack.c.h.bf16 %v600
    %v624 = vsel %vm217, %v622, 0.0
    %625 = vadd.xlane.f32.xlu0 %v624
    %v626 = vpop.xlane.xlu0 %625
    %v627 = vsel %vm217, %v623, 0.0
    %628 = vadd.xlane.f32.xlu0 %v627
    %v629 = vpop.xlane.xlu0 %628
    %630 = vst.msk [vmem:[#allocation2 + $0x20] sm:$0xff] %vm617, %v626
    %631 = vst.msk [vmem:[#allocation2 + $0x28] sm:$0xff] %vm617, %v629
    %v632 = vrot.slane %v316, 3
    %s634 = vtos %v632
    %v635 = vstv %s634
    %v636 = vpack.i.b16 %v635, %v635
    %v638 = vmul.bf16 %v208, %v636
    %v639 = vmul.bf16 %v209, %v636
    %v640 = vrot.slane %v317, 3
    %s642 = vtos %v640
    %v643 = vstv %s642
    %v644 = vpack.i.b16 %v643, %v643
    %v646 = vadd.bf16 %v638, %v644
    %v647 = vadd.bf16 %v639, %v644
    %v648 = vmax.bf16 %v646, 0
    %v649 = vmax.bf16 %v647, 0
    %v650 = vmul.bf16 %v210, %v636
    %v651 = vadd.bf16 %v650, %v644
    %v652 = vmax.bf16 %v651, 0
    %v653 = vunpack.c.l.bf16 %v648
    %v654 = vunpack.c.h.bf16 %v648
    %v655 = vunpack.c.l.bf16 %v649
    %v656 = vunpack.c.h.bf16 %v649
    %v657 = vsel %vm217, %v653, 0.0
    %658 = vadd.xlane.f32.xlu0 %v657
    %v659 = vpop.xlane.xlu0 %658
    %v660 = vsel %vm217, %v654, 0.0
    %661 = vadd.xlane.f32.xlu0 %v660
    %v662 = vpop.xlane.xlu0 %661
    %v663 = vsel %vm217, %v655, 0.0
    %664 = vadd.xlane.f32.xlu0 %v663
    %v665 = vpop.xlane.xlu0 %664
    %v666 = vsel %vm217, %v656, 0.0
    %667 = vadd.xlane.f32.xlu0 %v666
    %v668 = vpop.xlane.xlu0 %667
    %vm669 = vcmask 56368
    %670 = vst.msk [vmem:[#allocation2] sm:$0xff] %vm669, %v659
    %671 = vst.msk [vmem:[#allocation2 + $0x8] sm:$0xff] %vm669, %v662
    %672 = vst.msk [vmem:[#allocation2 + $0x10] sm:$0xff] %vm669, %v665
    %673 = vst.msk [vmem:[#allocation2 + $0x18] sm:$0xff] %vm669, %v668
    %v674 = vunpack.c.l.bf16 %v652
    %v675 = vunpack.c.h.bf16 %v652
    %v676 = vsel %vm217, %v674, 0.0
    %677 = vadd.xlane.f32.xlu0 %v676
    %v678 = vpop.xlane.xlu0 %677
    %v679 = vsel %vm217, %v675, 0.0
    %680 = vadd.xlane.f32.xlu0 %v679
    %v681 = vpop.xlane.xlu0 %680
    %682 = vst.msk [vmem:[#allocation2 + $0x20] sm:$0xff] %vm669, %v678
    %683 = vst.msk [vmem:[#allocation2 + $0x28] sm:$0xff] %vm669, %v681
    %v684 = vrot.slane %v368, 3
    %s686 = vtos %v684
    %v687 = vstv %s686
    %v688 = vpack.i.b16 %v687, %v687
    %v690 = vmul.bf16 %v208, %v688
    %v691 = vmul.bf16 %v209, %v688
    %v692 = vrot.slane %v377, 3
    %s694 = vtos %v692
    %v695 = vstv %s694
    %v696 = vpack.i.b16 %v695, %v695
    %v698 = vadd.bf16 %v690, %v696
    %v699 = vadd.bf16 %v691, %v696
    %v700 = vmax.bf16 %v698, 0
    %v701 = vmax.bf16 %v699, 0
    %v702 = vmul.bf16 %v210, %v688
    %v703 = vadd.bf16 %v702, %v696
    %v704 = vmax.bf16 %v703, 0
    %v705 = vunpack.c.l.bf16 %v700
    %v706 = vunpack.c.h.bf16 %v700
    %v707 = vunpack.c.l.bf16 %v701
    %v708 = vunpack.c.h.bf16 %v701
    %v709 = vsel %vm217, %v705, 0.0
    %710 = vadd.xlane.f32.xlu0 %v709
    %v711 = vpop.xlane.xlu0 %710
    %v712 = vsel %vm217, %v706, 0.0
    %713 = vadd.xlane.f32.xlu0 %v712
    %v714 = vpop.xlane.xlu0 %713
    %v715 = vsel %vm217, %v707, 0.0
    %716 = vadd.xlane.f32.xlu0 %v715
    %v717 = vpop.xlane.xlu0 %716
    %v718 = vsel %vm217, %v708, 0.0
    %719 = vadd.xlane.f32.xlu0 %v718
    %v720 = vpop.xlane.xlu0 %719
    %vm721 = vcmask 64568
    %722 = vst.msk [vmem:[#allocation2] sm:$0xff] %vm721, %v711
    %723 = vst.msk [vmem:[#allocation2 + $0x8] sm:$0xff] %vm721, %v714
    %724 = vst.msk [vmem:[#allocation2 + $0x10] sm:$0xff] %vm721, %v717
    %725 = vst.msk [vmem:[#allocation2 + $0x18] sm:$0xff] %vm721, %v720
    %v726 = vunpack.c.l.bf16 %v704
    %v727 = vunpack.c.h.bf16 %v704
    %v728 = vsel %vm217, %v726, 0.0
    %729 = vadd.xlane.f32.xlu0 %v728
    %v730 = vpop.xlane.xlu0 %729
    %v731 = vsel %vm217, %v727, 0.0
    %732 = vadd.xlane.f32.xlu0 %v731
    %v733 = vpop.xlane.xlu0 %732
    %734 = vst.msk [vmem:[#allocation2 + $0x20] sm:$0xff] %vm721, %v730
    %735 = vst.msk [vmem:[#allocation2 + $0x28] sm:$0xff] %vm721, %v733
    %v736 = vpack.c.bf16 %v311, %v311
    %v737 = vpack.c.bf16 %v315, %v315
    %s739 = vtos %v736
    %v740 = vstv %s739
    %v741 = vpack.i.b16 %v740, %v740
    %v743 = vmul.bf16 %v208, %v741
    %v744 = vmul.bf16 %v209, %v741
    %s746 = vtos %v737
    %v747 = vstv %s746
    %v748 = vpack.i.b16 %v747, %v747
    %v750 = vadd.bf16 %v743, %v748
    %v751 = vadd.bf16 %v744, %v748
    %v752 = vmax.bf16 %v750, 0
    %v753 = vmax.bf16 %v751, 0
    %v754 = vmul.bf16 %v210, %v741
    %v755 = vadd.bf16 %v754, %v748
    %v756 = vmax.bf16 %v755, 0
    %v757 = vunpack.c.l.bf16 %v752
    %v758 = vunpack.c.h.bf16 %v752
    %v759 = vunpack.c.l.bf16 %v753
    %v760 = vunpack.c.h.bf16 %v753
    %v761 = vsel %vm217, %v757, 0.0
    %762 = vadd.xlane.f32.xlu0 %v761
    %v763 = vpop.xlane.xlu0 %762
    %v764 = vsel %vm217, %v758, 0.0
    %765 = vadd.xlane.f32.xlu0 %v764
    %v766 = vpop.xlane.xlu0 %765
    %v767 = vsel %vm217, %v759, 0.0
    %768 = vadd.xlane.f32.xlu0 %v767
    %v769 = vpop.xlane.xlu0 %768
    %v770 = vsel %vm217, %v760, 0.0
    %771 = vadd.xlane.f32.xlu0 %v770
    %v772 = vpop.xlane.xlu0 %771
    %vm773 = vcmask 72768
    %774 = vst.msk [vmem:[#allocation2] sm:$0xff] %vm773, %v763
    %775 = vst.msk [vmem:[#allocation2 + $0x8] sm:$0xff] %vm773, %v766
    %776 = vst.msk [vmem:[#allocation2 + $0x10] sm:$0xff] %vm773, %v769
    %777 = vst.msk [vmem:[#allocation2 + $0x18] sm:$0xff] %vm773, %v772
    %v778 = vunpack.c.l.bf16 %v756
    %v779 = vunpack.c.h.bf16 %v756
    %v780 = vsel %vm217, %v778, 0.0
    %781 = vadd.xlane.f32.xlu0 %v780
    %v782 = vpop.xlane.xlu0 %781
    %v783 = vsel %vm217, %v779, 0.0
    %784 = vadd.xlane.f32.xlu0 %v783
    %v785 = vpop.xlane.xlu0 %784
    %786 = vst.msk [vmem:[#allocation2 + $0x20] sm:$0xff] %vm773, %v782
    %787 = vst.msk [vmem:[#allocation2 + $0x28] sm:$0xff] %vm773, %v785
    %v788 = vshrl.u32 %v736, 16
    %s791 = vtos %v788
    %v792 = vstv %s791
    %v793 = vpack.i.b16 %v792, %v792
    %v795 = vmul.bf16 %v208, %v793
    %v796 = vmul.bf16 %v209, %v793
    %v797 = vshrl.u32 %v737, 16
    %s800 = vtos %v797
    %v801 = vstv %s800
    %v802 = vpack.i.b16 %v801, %v801
    %v804 = vadd.bf16 %v795, %v802
    %v805 = vadd.bf16 %v796, %v802
    %v806 = vmax.bf16 %v804, 0
    %v807 = vmax.bf16 %v805, 0
    %v808 = vmul.bf16 %v210, %v793
    %v809 = vadd.bf16 %v808, %v802
    %v810 = vmax.bf16 %v809, 0
    %v811 = vunpack.c.l.bf16 %v806
    %v812 = vunpack.c.h.bf16 %v806
    %v813 = vunpack.c.l.bf16 %v807
    %v814 = vunpack.c.h.bf16 %v807
    %v815 = vsel %vm217, %v811, 0.0
    %816 = vadd.xlane.f32.xlu0 %v815
    %v817 = vpop.xlane.xlu0 %816
    %v818 = vsel %vm217, %v812, 0.0
    %819 = vadd.xlane.f32.xlu0 %v818
    %v820 = vpop.xlane.xlu0 %819
    %v821 = vsel %vm217, %v813, 0.0
    %822 = vadd.xlane.f32.xlu0 %v821
    %v823 = vpop.xlane.xlu0 %822
    %v824 = vsel %vm217, %v814, 0.0
    %825 = vadd.xlane.f32.xlu0 %v824
    %v826 = vpop.xlane.xlu0 %825
    %vm827 = vcmask 80968
    %828 = vst.msk [vmem:[#allocation2] sm:$0xff] %vm827, %v817
    %829 = vst.msk [vmem:[#allocation2 + $0x8] sm:$0xff] %vm827, %v820
    %830 = vst.msk [vmem:[#allocation2 + $0x10] sm:$0xff] %vm827, %v823
    %831 = vst.msk [vmem:[#allocation2 + $0x18] sm:$0xff] %vm827, %v826
    %v832 = vunpack.c.l.bf16 %v810
    %v833 = vunpack.c.h.bf16 %v810
    %v834 = vsel %vm217, %v832, 0.0
    %835 = vadd.xlane.f32.xlu0 %v834
    %v836 = vpop.xlane.xlu0 %835
    %v837 = vsel %vm217, %v833, 0.0
    %838 = vadd.xlane.f32.xlu0 %v837
    %v839 = vpop.xlane.xlu0 %838
    %840 = vst.msk [vmem:[#allocation2 + $0x20] sm:$0xff] %vm827, %v836
    %841 = vst.msk [vmem:[#allocation2 + $0x28] sm:$0xff] %vm827, %v839
    %v843 = vrot.slane %v736, 1
    %s845 = vtos %v843
    %v846 = vstv %s845
    %v847 = vpack.i.b16 %v846, %v846
    %v849 = vmul.bf16 %v208, %v847
    %v850 = vmul.bf16 %v209, %v847
    %v852 = vrot.slane %v737, 1
    %s854 = vtos %v852
    %v855 = vstv %s854
    %v856 = vpack.i.b16 %v855, %v855
    %v858 = vadd.bf16 %v849, %v856
    %v859 = vadd.bf16 %v850, %v856
    %v860 = vmax.bf16 %v858, 0
    %v861 = vmax.bf16 %v859, 0
    %v862 = vmul.bf16 %v210, %v847
    %v863 = vadd.bf16 %v862, %v856
    %v864 = vmax.bf16 %v863, 0
    %v865 = vunpack.c.l.bf16 %v860
    %v866 = vunpack.c.h.bf16 %v860
    %v867 = vunpack.c.l.bf16 %v861
    %v868 = vunpack.c.h.bf16 %v861
    %v869 = vsel %vm217, %v865, 0.0
    %870 = vadd.xlane.f32.xlu0 %v869
    %v871 = vpop.xlane.xlu0 %870
    %v872 = vsel %vm217, %v866, 0.0
    %873 = vadd.xlane.f32.xlu0 %v872
    %v874 = vpop.xlane.xlu0 %873
    %v875 = vsel %vm217, %v867, 0.0
    %876 = vadd.xlane.f32.xlu0 %v875
    %v877 = vpop.xlane.xlu0 %876
    %v878 = vsel %vm217, %v868, 0.0
    %879 = vadd.xlane.f32.xlu0 %v878
    %v880 = vpop.xlane.xlu0 %879
    %vm881 = vcmask 89168
    %882 = vst.msk [vmem:[#allocation2] sm:$0xff] %vm881, %v871
    %883 = vst.msk [vmem:[#allocation2 + $0x8] sm:$0xff] %vm881, %v874
    %884 = vst.msk [vmem:[#allocation2 + $0x10] sm:$0xff] %vm881, %v877
    %885 = vst.msk [vmem:[#allocation2 + $0x18] sm:$0xff] %vm881, %v880
    %v886 = vunpack.c.l.bf16 %v864
    %v887 = vunpack.c.h.bf16 %v864
    %v888 = vsel %vm217, %v886, 0.0
    %889 = vadd.xlane.f32.xlu0 %v888
    %v890 = vpop.xlane.xlu0 %889
    %v891 = vsel %vm217, %v887, 0.0
    %892 = vadd.xlane.f32.xlu0 %v891
    %v893 = vpop.xlane.xlu0 %892
    %894 = vst.msk [vmem:[#allocation2 + $0x20] sm:$0xff] %vm881, %v890
    %895 = vst.msk [vmem:[#allocation2 + $0x28] sm:$0xff] %vm881, %v893
    %v896 = vrot.slane %v788, 1
    %s898 = vtos %v896
    %v899 = vstv %s898
    %v900 = vpack.i.b16 %v899, %v899
    %v902 = vmul.bf16 %v208, %v900
    %v903 = vmul.bf16 %v209, %v900
    %v904 = vrot.slane %v797, 1
    %s906 = vtos %v904
    %v907 = vstv %s906
    %v908 = vpack.i.b16 %v907, %v907
    %v910 = vadd.bf16 %v902, %v908
    %v911 = vadd.bf16 %v903, %v908
    %v912 = vmax.bf16 %v910, 0
    %v913 = vmax.bf16 %v911, 0
    %v914 = vmul.bf16 %v210, %v900
    %v915 = vadd.bf16 %v914, %v908
    %v916 = vmax.bf16 %v915, 0
    %v917 = vunpack.c.l.bf16 %v912
    %v918 = vunpack.c.h.bf16 %v912
    %v919 = vunpack.c.l.bf16 %v913
    %v920 = vunpack.c.h.bf16 %v913
    %v921 = vsel %vm217, %v917, 0.0
    %922 = vadd.xlane.f32.xlu0 %v921
    %v923 = vpop.xlane.xlu0 %922
    %v924 = vsel %vm217, %v918, 0.0
    %925 = vadd.xlane.f32.xlu0 %v924
    %v926 = vpop.xlane.xlu0 %925
    %v927 = vsel %vm217, %v919, 0.0
    %928 = vadd.xlane.f32.xlu0 %v927
    %v929 = vpop.xlane.xlu0 %928
    %v930 = vsel %vm217, %v920, 0.0
    %931 = vadd.xlane.f32.xlu0 %v930
    %v932 = vpop.xlane.xlu0 %931
    %vm933 = vcmask 97368
    %934 = vst.msk [vmem:[#allocation2] sm:$0xff] %vm933, %v923
    %935 = vst.msk [vmem:[#allocation2 + $0x8] sm:$0xff] %vm933, %v926
    %936 = vst.msk [vmem:[#allocation2 + $0x10] sm:$0xff] %vm933, %v929
    %937 = vst.msk [vmem:[#allocation2 + $0x18] sm:$0xff] %vm933, %v932
    %v938 = vunpack.c.l.bf16 %v916
    %v939 = vunpack.c.h.bf16 %v916
    %v940 = vsel %vm217, %v938, 0.0
    %941 = vadd.xlane.f32.xlu0 %v940
    %v942 = vpop.xlane.xlu0 %941
    %v943 = vsel %vm217, %v939, 0.0
    %944 = vadd.xlane.f32.xlu0 %v943
    %v945 = vpop.xlane.xlu0 %944
    %946 = vst.msk [vmem:[#allocation2 + $0x20] sm:$0xff] %vm933, %v942
    %947 = vst.msk [vmem:[#allocation2 + $0x28] sm:$0xff] %vm933, %v945
    %v948 = vrot.slane %v736, 2
    %s950 = vtos %v948
    %v951 = vstv %s950
    %v952 = vpack.i.b16 %v951, %v951
    %v954 = vmul.bf16 %v208, %v952
    %v955 = vmul.bf16 %v209, %v952
    %v956 = vrot.slane %v737, 2
    %s958 = vtos %v956
    %v959 = vstv %s958
    %v960 = vpack.i.b16 %v959, %v959
    %v962 = vadd.bf16 %v954, %v960
    %v963 = vadd.bf16 %v955, %v960
    %v964 = vmax.bf16 %v962, 0
    %v965 = vmax.bf16 %v963, 0
    %v966 = vmul.bf16 %v210, %v952
    %v967 = vadd.bf16 %v966, %v960
    %v968 = vmax.bf16 %v967, 0
    %v969 = vunpack.c.l.bf16 %v964
    %v970 = vunpack.c.h.bf16 %v964
    %v971 = vunpack.c.l.bf16 %v965
    %v972 = vunpack.c.h.bf16 %v965
    %v973 = vsel %vm217, %v969, 0.0
    %974 = vadd.xlane.f32.xlu0 %v973
    %v975 = vpop.xlane.xlu0 %974
    %v976 = vsel %vm217, %v970, 0.0
    %977 = vadd.xlane.f32.xlu0 %v976
    %v978 = vpop.xlane.xlu0 %977
    %v979 = vsel %vm217, %v971, 0.0
    %980 = vadd.xlane.f32.xlu0 %v979
    %v981 = vpop.xlane.xlu0 %980
    %v982 = vsel %vm217, %v972, 0.0
    %983 = vadd.xlane.f32.xlu0 %v982
    %v984 = vpop.xlane.xlu0 %983
    %vm985 = vcmask 105568
    %986 = vst.msk [vmem:[#allocation2] sm:$0xff] %vm985, %v975
    %987 = vst.msk [vmem:[#allocation2 + $0x8] sm:$0xff] %vm985, %v978
    %988 = vst.msk [vmem:[#allocation2 + $0x10] sm:$0xff] %vm985, %v981
    %989 = vst.msk [vmem:[#allocation2 + $0x18] sm:$0xff] %vm985, %v984
    %v990 = vunpack.c.l.bf16 %v968
    %v991 = vunpack.c.h.bf16 %v968
    %v992 = vsel %vm217, %v990, 0.0
    %993 = vadd.xlane.f32.xlu0 %v992
    %v994 = vpop.xlane.xlu0 %993
    %v995 = vsel %vm217, %v991, 0.0
    %996 = vadd.xlane.f32.xlu0 %v995
    %v997 = vpop.xlane.xlu0 %996
    %998 = vst.msk [vmem:[#allocation2 + $0x20] sm:$0xff] %vm985, %v994
    %999 = vst.msk [vmem:[#allocation2 + $0x28] sm:$0xff] %vm985, %v997
    %v1000 = vrot.slane %v788, 2
    %s1002 = vtos %v1000
    %v1003 = vstv %s1002
    %v1004 = vpack.i.b16 %v1003, %v1003
    %v1006 = vmul.bf16 %v208, %v1004
    %v1007 = vmul.bf16 %v209, %v1004
    %v1008 = vrot.slane %v797, 2
    %s1010 = vtos %v1008
    %v1011 = vstv %s1010
    %v1012 = vpack.i.b16 %v1011, %v1011
    %v1014 = vadd.bf16 %v1006, %v1012
    %v1015 = vadd.bf16 %v1007, %v1012
    %v1016 = vmax.bf16 %v1014, 0
    %v1017 = vmax.bf16 %v1015, 0
    %v1018 = vmul.bf16 %v210, %v1004
    %v1019 = vadd.bf16 %v1018, %v1012
    %v1020 = vmax.bf16 %v1019, 0
    %v1021 = vunpack.c.l.bf16 %v1016
    %v1022 = vunpack.c.h.bf16 %v1016
    %v1023 = vunpack.c.l.bf16 %v1017
    %v1024 = vunpack.c.h.bf16 %v1017
    %v1025 = vsel %vm217, %v1021, 0.0
    %1026 = vadd.xlane.f32.xlu0 %v1025
    %v1027 = vpop.xlane.xlu0 %1026
    %v1028 = vsel %vm217, %v1022, 0.0
    %1029 = vadd.xlane.f32.xlu0 %v1028
    %v1030 = vpop.xlane.xlu0 %1029
    %v1031 = vsel %vm217, %v1023, 0.0
    %1032 = vadd.xlane.f32.xlu0 %v1031
    %v1033 = vpop.xlane.xlu0 %1032
    %v1034 = vsel %vm217, %v1024, 0.0
    %1035 = vadd.xlane.f32.xlu0 %v1034
    %v1036 = vpop.xlane.xlu0 %1035
    %vm1037 = vcmask 113768
    %1038 = vst.msk [vmem:[#allocation2] sm:$0xff] %vm1037, %v1027
    %1039 = vst.msk [vmem:[#allocation2 + $0x8] sm:$0xff] %vm1037, %v1030
    %1040 = vst.msk [vmem:[#allocation2 + $0x10] sm:$0xff] %vm1037, %v1033
    %1041 = vst.msk [vmem:[#allocation2 + $0x18] sm:$0xff] %vm1037, %v1036
    %v1042 = vunpack.c.l.bf16 %v1020
    %v1043 = vunpack.c.h.bf16 %v1020
    %v1044 = vsel %vm217, %v1042, 0.0
    %1045 = vadd.xlane.f32.xlu0 %v1044
    %v1046 = vpop.xlane.xlu0 %1045
    %v1047 = vsel %vm217, %v1043, 0.0
    %1048 = vadd.xlane.f32.xlu0 %v1047
    %v1049 = vpop.xlane.xlu0 %1048
    %1050 = vst.msk [vmem:[#allocation2 + $0x20] sm:$0xff] %vm1037, %v1046
    %1051 = vst.msk [vmem:[#allocation2 + $0x28] sm:$0xff] %vm1037, %v1049
    %v1052 = vrot.slane %v736, 3
    %s1054 = vtos %v1052
    %v1055 = vstv %s1054
    %v1056 = vpack.i.b16 %v1055, %v1055
    %v1058 = vmul.bf16 %v208, %v1056
    %v1059 = vmul.bf16 %v209, %v1056
    %v1060 = vrot.slane %v737, 3
    %s1062 = vtos %v1060
    %v1063 = vstv %s1062
    %v1064 = vpack.i.b16 %v1063, %v1063
    %v1066 = vadd.bf16 %v1058, %v1064
    %v1067 = vadd.bf16 %v1059, %v1064
    %v1068 = vmax.bf16 %v1066, 0
    %v1069 = vmax.bf16 %v1067, 0
    %v1070 = vmul.bf16 %v210, %v1056
    %v1071 = vadd.bf16 %v1070, %v1064
    %v1072 = vmax.bf16 %v1071, 0
    %v1073 = vunpack.c.l.bf16 %v1068
    %v1074 = vunpack.c.h.bf16 %v1068
    %v1075 = vunpack.c.l.bf16 %v1069
    %v1076 = vunpack.c.h.bf16 %v1069
    %v1077 = vsel %vm217, %v1073, 0.0
    %1078 = vadd.xlane.f32.xlu0 %v1077
    %v1079 = vpop.xlane.xlu0 %1078
    %v1080 = vsel %vm217, %v1074, 0.0
    %1081 = vadd.xlane.f32.xlu0 %v1080
    %v1082 = vpop.xlane.xlu0 %1081
    %v1083 = vsel %vm217, %v1075, 0.0
    %1084 = vadd.xlane.f32.xlu0 %v1083
    %v1085 = vpop.xlane.xlu0 %1084
    %v1086 = vsel %vm217, %v1076, 0.0
    %1087 = vadd.xlane.f32.xlu0 %v1086
    %v1088 = vpop.xlane.xlu0 %1087
    %vm1089 = vcmask 121968
    %1090 = vst.msk [vmem:[#allocation2] sm:$0xff] %vm1089, %v1079
    %1091 = vst.msk [vmem:[#allocation2 + $0x8] sm:$0xff] %vm1089, %v1082
    %1092 = vst.msk [vmem:[#allocation2 + $0x10] sm:$0xff] %vm1089, %v1085
    %1093 = vst.msk [vmem:[#allocation2 + $0x18] sm:$0xff] %vm1089, %v1088
    %v1094 = vunpack.c.l.bf16 %v1072
    %v1095 = vunpack.c.h.bf16 %v1072
    %v1096 = vsel %vm217, %v1094, 0.0
    %1097 = vadd.xlane.f32.xlu0 %v1096
    %v1098 = vpop.xlane.xlu0 %1097
    %v1099 = vsel %vm217, %v1095, 0.0
    %1100 = vadd.xlane.f32.xlu0 %v1099
    %v1101 = vpop.xlane.xlu0 %1100
    %1102 = vst.msk [vmem:[#allocation2 + $0x20] sm:$0xff] %vm1089, %v1098
    %1103 = vst.msk [vmem:[#allocation2 + $0x28] sm:$0xff] %vm1089, %v1101
    %v1104 = vrot.slane %v788, 3
    %s1106 = vtos %v1104
    %v1107 = vstv %s1106
    %v1108 = vpack.i.b16 %v1107, %v1107
    %v1110 = vmul.bf16 %v208, %v1108
    %v1111 = vmul.bf16 %v209, %v1108
    %v1112 = vrot.slane %v797, 3
    %s1114 = vtos %v1112
    %v1115 = vstv %s1114
    %v1116 = vpack.i.b16 %v1115, %v1115
    %v1118 = vadd.bf16 %v1110, %v1116
    %v1119 = vadd.bf16 %v1111, %v1116
    %v1120 = vmax.bf16 %v1118, 0
    %v1121 = vmax.bf16 %v1119, 0
    %v1122 = vmul.bf16 %v210, %v1108
    %v1123 = vadd.bf16 %v1122, %v1116
    %v1124 = vmax.bf16 %v1123, 0
    %v1125 = vunpack.c.l.bf16 %v1120
    %v1126 = vunpack.c.h.bf16 %v1120
    %v1127 = vunpack.c.l.bf16 %v1121
    %v1128 = vunpack.c.h.bf16 %v1121
    %v1129 = vsel %vm217, %v1125, 0.0
    %1130 = vadd.xlane.f32.xlu0 %v1129
    %v1131 = vpop.xlane.xlu0 %1130
    %v1132 = vsel %vm217, %v1126, 0.0
    %1133 = vadd.xlane.f32.xlu0 %v1132
    %v1134 = vpop.xlane.xlu0 %1133
    %v1135 = vsel %vm217, %v1127, 0.0
    %1136 = vadd.xlane.f32.xlu0 %v1135
    %v1137 = vpop.xlane.xlu0 %1136
    %v1138 = vsel %vm217, %v1128, 0.0
    %1139 = vadd.xlane.f32.xlu0 %v1138
    %v1140 = vpop.xlane.xlu0 %1139
    %vm1141 = vcmask 130168
    %1142 = vst.msk [vmem:[#allocation2] sm:$0xff] %vm1141, %v1131
    %1143 = vst.msk [vmem:[#allocation2 + $0x8] sm:$0xff] %vm1141, %v1134
    %1144 = vst.msk [vmem:[#allocation2 + $0x10] sm:$0xff] %vm1141, %v1137
    %1145 = vst.msk [vmem:[#allocation2 + $0x18] sm:$0xff] %vm1141, %v1140
    %v1146 = vunpack.c.l.bf16 %v1124
    %v1147 = vunpack.c.h.bf16 %v1124
    %v1148 = vsel %vm217, %v1146, 0.0
    %1149 = vadd.xlane.f32.xlu0 %v1148
    %v1150 = vpop.xlane.xlu0 %1149
    %v1151 = vsel %vm217, %v1147, 0.0
    %1152 = vadd.xlane.f32.xlu0 %v1151
    %v1153 = vpop.xlane.xlu0 %1152
    %1154 = vst.msk [vmem:[#allocation2 + $0x20] sm:$0xff] %vm1141, %v1150
    %1155 = vst.msk [vmem:[#allocation2 + $0x28] sm:$0xff] %vm1141, %v1153
    %v1156 = vld [vmem:[%s7] sm:$0x3]
    %v1157 = vld [vmem:[#allocation2] sm:$0xff]
    %v1158 = vld [vmem:[#allocation2 + $0x8] sm:$0xff]
    %v1159 = vld [vmem:[#allocation2 + $0x10] sm:$0xff]
    %v1160 = vld [vmem:[#allocation2 + $0x18] sm:$0xff]
    %v1161 = vld [vmem:[#allocation2 + $0x20] sm:$0xff]
    %v1162 = vld [vmem:[#allocation2 + $0x28] sm:$0xff]
    %v1164 = vsel %vm88, %v1156, 0
    %1166 = vmatprep.subr.mxu0 0.0
    %1167 = vmatpush1.msra.mxu0 0.0
    %1168 = vmatprep.subr.mxu0 0.0
    %1169 = vmatpush1.msra.mxu0 0.0
    %1170 = vmatprep.subr.mxu0 0.0
    %1171 = vmatpush1.msra.mxu0 0.0
    %1172 = vmatprep.subr.mxu0 0.0
    %1173 = vmatpush1.msra.mxu0 0.0
    %1174 = vmatprep.subr.mxu0 0.0
    %1175 = vmatpush1.msra.mxu0 0.0
    %1176 = vmatprep.subr.mxu0 0.0
    %1177 = vmatpush1.msra.mxu0 0.0
    %1178 = vmatprep.subr.mxu0 0.0
    %1179 = vmatpush1.msra.mxu0 0.0
    %1180 = vmatprep.subr.mxu0 0.0
    %1181 = vmatpush1.msra.mxu0 0.0
    %1182 = vmatprep.subr.mxu0 0.0
    %1183 = vmatpush1.msra.mxu0 0.0
    %1184 = vmatprep.subr.mxu0 0.0
    %1185 = vmatpush1.msra.mxu0 0.0
    %1186 = vmatprep.subr.mxu0 0.0
    %1187 = vmatpush1.msra.mxu0 %v1162
    %1188 = vmatprep.subr.mxu0 0.0
    %1189 = vmatpush1.msra.mxu0 %v1161
    %1190 = vmatprep.subr.mxu0 0.0
    %1191 = vmatpush1.msra.mxu0 %v1160
    %1192 = vmatprep.subr.mxu0 0.0
    %1193 = vmatpush1.msra.mxu0 %v1159
    %1194 = vmatprep.subr.mxu0 0.0
    %1195 = vmatpush1.msra.mxu0 %v1158
    %1196 = vmatprep.subr.mxu0 0.0
    %1197 = vmatpush1.msra.mxu0 %v1157
    %1198 = vmatprep.subr.mxu0 0.0
    %1199 = vmatpush2.msra.mxu0 0.0
    %1200 = vmatprep.subr.mxu0 0.0
    %1201 = vmatpush2.msra.mxu0 0.0
    %1202 = vmatprep.subr.mxu0 0.0
    %1203 = vmatpush2.msra.mxu0 0.0
    %1204 = vmatprep.subr.mxu0 0.0
    %1205 = vmatpush2.msra.mxu0 0.0
    %1206 = vmatprep.subr.mxu0 0.0
    %1207 = vmatpush2.msra.mxu0 0.0
    %1208 = vmatprep.subr.mxu0 0.0
    %1209 = vmatpush2.msra.mxu0 0.0
    %1210 = vmatprep.subr.mxu0 0.0
    %1211 = vmatpush2.msra.mxu0 0.0
    %1212 = vmatprep.subr.mxu0 0.0
    %1213 = vmatpush2.msra.mxu0 0.0
    %1214 = vmatprep.subr.mxu0 0.0
    %1215 = vmatpush2.msra.mxu0 0.0
    %1216 = vmatprep.subr.mxu0 0.0
    %1217 = vmatpush2.msra.mxu0 0.0
    %1218 = vmatprep.subr.mxu0 0.0
    %1219 = vmatpush2.msra.mxu0 0.0
    %1220 = vmatprep.subr.mxu0 0.0
    %1221 = vmatpush2.msra.mxu0 0.0
    %1222 = vmatprep.subr.mxu0 0.0
    %1223 = vmatpush2.msra.mxu0 0.0
    %1224 = vmatprep.subr.mxu0 0.0
    %1225 = vmatpush2.msra.mxu0 0.0
    %1226 = vmatprep.subr.mxu0 0.0
    %1227 = vmatpush2.msra.mxu0 0.0
    %1228 = vmatprep.subr.mxu0 0.0
    %1229 = vmatpush2.msra.mxu0 0.0
    %1230 = vmatprep.mubr.f32.mxu0 0.0
    %1231 = vmatmul.mubr.f32.gmra.mxu0 %v1164
    %v1232 = vpop.f32.mrf.mxu0
    %v1233 = vadd.f32 0.0, %v1232
    %v1234 = vpop.f32.mrf.mxu0
    %1235 = vdwg.mxu0
    %v1236 = vmul.f32 %v1233, 0.0013020834
    %v1237 = vld [vmem:[%s8] sm:$0xff]
    %v1238 = vld [vmem:[%s8 + $0x8] sm:$0xff]
    %v1239 = vld [vmem:[%s9] sm:$0x1]
    %v1241 = vlaneseq
    %v1242 = vshrl.u32 %v1241, 7
    %v1243 = vsub.s32 0, %v1242
    %v1244 = vrot.slane %v1239, %v1243
    %vm1246 = vcmask 130048
    %v1248 = vsel %vm1246, %v1236, 0
    %1250 = vmatprep.subr.mxu0 0.0
    %1251 = vmatpush1.msra.mxu0 0.0
    %1252 = vmatprep.subr.mxu0 0.0
    %1253 = vmatpush1.msra.mxu0 0.0
    %1254 = vmatprep.subr.mxu0 0.0
    %1255 = vmatpush1.msra.mxu0 0.0
    %1256 = vmatprep.subr.mxu0 0.0
    %1257 = vmatpush1.msra.mxu0 0.0
    %1258 = vmatprep.subr.mxu0 0.0
    %1259 = vmatpush1.msra.mxu0 0.0
    %1260 = vmatprep.subr.mxu0 0.0
    %1261 = vmatpush1.msra.mxu0 0.0
    %1262 = vmatprep.subr.mxu0 0.0
    %1263 = vmatpush1.msra.mxu0 0.0
    %1264 = vmatprep.subr.mxu0 0.0
    %1265 = vmatpush1.msra.mxu0 0.0
    %1266 = vmatprep.subr.mxu0 0.0
    %1267 = vmatpush1.msra.mxu0 0.0
    %1268 = vmatprep.subr.mxu0 0.0
    %1269 = vmatpush1.msra.mxu0 0.0
    %1270 = vmatprep.subr.mxu0 0.0
    %1271 = vmatpush1.msra.mxu0 0.0
    %1272 = vmatprep.subr.mxu0 0.0
    %1273 = vmatpush1.msra.mxu0 0.0
    %1274 = vmatprep.subr.mxu0 0.0
    %1275 = vmatpush1.msra.mxu0 0.0
    %1276 = vmatprep.subr.mxu0 0.0
    %1277 = vmatpush1.msra.mxu0 0.0
    %1278 = vmatprep.subr.mxu0 0.0
    %1279 = vmatpush1.msra.mxu0 %v1238
    %1280 = vmatprep.subr.mxu0 0.0
    %1281 = vmatpush1.msra.mxu0 %v1237
    %1282 = vmatprep.subr.mxu0 0.0
    %1283 = vmatpush2.msra.mxu0 0.0
    %1284 = vmatprep.subr.mxu0 0.0
    %1285 = vmatpush2.msra.mxu0 0.0
    %1286 = vmatprep.subr.mxu0 0.0
    %1287 = vmatpush2.msra.mxu0 0.0
    %1288 = vmatprep.subr.mxu0 0.0
    %1289 = vmatpush2.msra.mxu0 0.0
    %1290 = vmatprep.subr.mxu0 0.0
    %1291 = vmatpush2.msra.mxu0 0.0
    %1292 = vmatprep.subr.mxu0 0.0
    %1293 = vmatpush2.msra.mxu0 0.0
    %1294 = vmatprep.subr.mxu0 0.0
    %1295 = vmatpush2.msra.mxu0 0.0
    %1296 = vmatprep.subr.mxu0 0.0
    %1297 = vmatpush2.msra.mxu0 0.0
    %1298 = vmatprep.subr.mxu0 0.0
    %1299 = vmatpush2.msra.mxu0 0.0
    %1300 = vmatprep.subr.mxu0 0.0
    %1301 = vmatpush2.msra.mxu0 0.0
    %1302 = vmatprep.subr.mxu0 0.0
    %1303 = vmatpush2.msra.mxu0 0.0
    %1304 = vmatprep.subr.mxu0 0.0
    %1305 = vmatpush2.msra.mxu0 0.0
    %1306 = vmatprep.subr.mxu0 0.0
    %1307 = vmatpush2.msra.mxu0 0.0
    %1308 = vmatprep.subr.mxu0 0.0
    %1309 = vmatpush2.msra.mxu0 0.0
    %1310 = vmatprep.subr.mxu0 0.0
    %1311 = vmatpush2.msra.mxu0 0.0
    %1312 = vmatprep.subr.mxu0 0.0
    %1313 = vmatpush2.msra.mxu0 0.0
    %1314 = vmatprep.mubr.f32.mxu0 0.0
    %1315 = vmatmul.mubr.f32.gmra.mxu0 %v1248
    %v1316 = vpop.f32.mrf.mxu0
    %v1317 = vadd.f32 %v1244, %v1316
    %v1318 = vpop.f32.mrf.mxu0
    %1319 = vdwg.mxu0
    %v1320 = vtanh.pop %v1317
    %v1321 = vld [vmem:[%s10] sm:$0xff]
    %v1322 = vld [vmem:[%s10 + $0x8] sm:$0xff]
    %v1323 = vld [vmem:[%s10 + $0x10] sm:$0xff]
    %v1324 = vld [vmem:[%s10 + $0x18] sm:$0xff]
    %v1325 = vld [vmem:[%s11] sm:$0x1]
    %v1327 = vlaneseq
    %v1328 = vshrl.u32 %v1327, 7
    %v1329 = vsub.s32 0, %v1328
    %v1330 = vrot.slane %v1325, %v1329
    %v1333 = vsel %vm217, %v1320, 0
    %1335 = vmatprep.subr.mxu0 0.0
    %1336 = vmatpush1.msra.mxu0 0.0
    %1337 = vmatprep.subr.mxu0 0.0
    %1338 = vmatpush1.msra.mxu0 0.0
    %1339 = vmatprep.subr.mxu0 0.0
    %1340 = vmatpush1.msra.mxu0 0.0
    %1341 = vmatprep.subr.mxu0 0.0
    %1342 = vmatpush1.msra.mxu0 0.0
    %1343 = vmatprep.subr.mxu0 0.0
    %1344 = vmatpush1.msra.mxu0 0.0
    %1345 = vmatprep.subr.mxu0 0.0
    %1346 = vmatpush1.msra.mxu0 0.0
    %1347 = vmatprep.subr.mxu0 0.0
    %1348 = vmatpush1.msra.mxu0 0.0
    %1349 = vmatprep.subr.mxu0 0.0
    %1350 = vmatpush1.msra.mxu0 0.0
    %1351 = vmatprep.subr.mxu0 0.0
    %1352 = vmatpush1.msra.mxu0 0.0
    %1353 = vmatprep.subr.mxu0 0.0
    %1354 = vmatpush1.msra.mxu0 0.0
    %1355 = vmatprep.subr.mxu0 0.0
    %1356 = vmatpush1.msra.mxu0 0.0
    %1357 = vmatprep.subr.mxu0 0.0
    %1358 = vmatpush1.msra.mxu0 0.0
    %1359 = vmatprep.subr.mxu0 0.0
    %1360 = vmatpush1.msra.mxu0 %v1324
    %1361 = vmatprep.subr.mxu0 0.0
    %1362 = vmatpush1.msra.mxu0 %v1323
    %1363 = vmatprep.subr.mxu0 0.0
    %1364 = vmatpush1.msra.mxu0 %v1322
    %1365 = vmatprep.subr.mxu0 0.0
    %1366 = vmatpush1.msra.mxu0 %v1321
    %1367 = vmatprep.subr.mxu0 0.0
    %1368 = vmatpush2.msra.mxu0 0.0
    %1369 = vmatprep.subr.mxu0 0.0
    %1370 = vmatpush2.msra.mxu0 0.0
    %1371 = vmatprep.subr.mxu0 0.0
    %1372 = vmatpush2.msra.mxu0 0.0
    %1373 = vmatprep.subr.mxu0 0.0
    %1374 = vmatpush2.msra.mxu0 0.0
    %1375 = vmatprep.subr.mxu0 0.0
    %1376 = vmatpush2.msra.mxu0 0.0
    %1377 = vmatprep.subr.mxu0 0.0
    %1378 = vmatpush2.msra.mxu0 0.0
    %1379 = vmatprep.subr.mxu0 0.0
    %1380 = vmatpush2.msra.mxu0 0.0
    %1381 = vmatprep.subr.mxu0 0.0
    %1382 = vmatpush2.msra.mxu0 0.0
    %1383 = vmatprep.subr.mxu0 0.0
    %1384 = vmatpush2.msra.mxu0 0.0
    %1385 = vmatprep.subr.mxu0 0.0
    %1386 = vmatpush2.msra.mxu0 0.0
    %1387 = vmatprep.subr.mxu0 0.0
    %1388 = vmatpush2.msra.mxu0 0.0
    %1389 = vmatprep.subr.mxu0 0.0
    %1390 = vmatpush2.msra.mxu0 0.0
    %1391 = vmatprep.subr.mxu0 0.0
    %1392 = vmatpush2.msra.mxu0 0.0
    %1393 = vmatprep.subr.mxu0 0.0
    %1394 = vmatpush2.msra.mxu0 0.0
    %1395 = vmatprep.subr.mxu0 0.0
    %1396 = vmatpush2.msra.mxu0 0.0
    %1397 = vmatprep.subr.mxu0 0.0
    %1398 = vmatpush2.msra.mxu0 0.0
    %1399 = vmatprep.mubr.f32.mxu0 0.0
    %1400 = vmatmul.mubr.f32.gmra.mxu0 %v1333
    %v1401 = vpop.f32.mrf.mxu0
    %v1402 = vadd.f32 %v1330, %v1401
    %v1403 = vpop.f32.mrf.mxu0
    %1404 = vdwg.mxu0
    %vm1405 = vcmask 41984
    %1406 = vst.msk [vmem:[#allocation3] sm:$0x3] %vm1405, %v1402
    // Predicated region
    $region50: #{_lambda_.1} parent=1 // pred_check
      _
    $region51: #{_lambda_.1} parent=1 // pred_check_branch
      %1408 = sbr.rel (0) target = $region53
    $region52: #{_lambda_.1} parent=1 // pred_region
      %s1410 = ssub.s32 32, 32
      %1411 = vsyncadd [#allocation4], %s1410
      %s1413 = sshll.u32 [#allocation3], 4
      %s1414 = int_to_ptr.vmem [resolvable:$true] %s1413
      %1416 = dma.vmem_to_hbm [thread:$0]  %s1414, 32, %s12, [#allocation4]
    $region53: #{_lambda_.1} parent=1 // pred_fallthru
      _
    // Predicated region
    $region54: #{_lambda_.1} parent=1 // pred_check
      _
    $region55: #{_lambda_.1} parent=1 // pred_check_branch
      %1418 = sbr.rel (0) target = $region57
    $region56: #{_lambda_.1} parent=1 // pred_region
      %1419 = dma.done [#allocation4], 32
    $region57: #{_lambda_.1} parent=1 // pred_fallthru
      _
    %1420 = vsyncpa [#allocation4], 1

</llo_original>
